<compile_context>
chip_gen: v5e
topology: v5e:2x2
jax: 0.10.0
libtpu: 0.0.40
codegen_flags: <defaults>
</compile_context>

<pallas_src>
import functools

import numpy as np

import jax
import jax.numpy as jnp
from jax.experimental import pallas as pl
from jax.experimental.pallas import tpu as pltpu


# ----------------------------------------------------------------------------
# Fused Pallas kernel: full backbone + depth/sn head for one image.
# Features are (C, H*W) f32 (sublane = channels, lane = flattened spatial).
# ----------------------------------------------------------------------------
def _fused_depth_sn_kernel(
    x_ref, masks_ref,
    wb1_ref, bb1_ref, wb2_ref, bb2_ref,
    wd1_ref, bd1_ref, wd2_ref, bd2_ref,
    ws1_ref, bs1_ref, ws2_ref, bs2_ref,
    depth_ref, sn_ref,
    *, H, W):
    HW = H * W

    def build_patches(feat):
        """feat (C, HW) -> im2col patches (9*C, HW).

        Each 3x3 tap is a lane-roll of the flattened feature (XLU) with the
        out-of-image halo zeroed by a precomputed mask; all 9 taps are folded
        into the matmul contraction dimension.
        """
        taps = []
        t = 0
        for dy in (-1, 0, 1):
            for dx in (-1, 0, 1):
                if dy == 0 and dx == 0:
                    taps.append(feat)
                else:
                    shift = (-(dy * W + dx)) % HW
                    shifted = pltpu.roll(feat, shift=shift, axis=1)
                    taps.append(shifted * masks_ref[t])   # (1, HW) mask bcast
                t += 1
        return jnp.concatenate(taps, axis=0)               # (9*C, HW)

    def conv(patches, w_ref, b_ref, relu=False):
        # w_ref: (Cout, 9*Cin), b_ref: (Cout, 1) -> out (Cout, HW), lane-dense.
        out = jnp.dot(w_ref[...], patches,
                      preferred_element_type=jnp.float32) + b_ref[...]
        if relu:
            out = jnp.maximum(out, 0.0)
        return out

    x = x_ref[0]                                            # (Cin_pad, HW)

    # backbone
    f = conv(build_patches(x), wb1_ref, bb1_ref, relu=True)
    f = conv(build_patches(f), wb2_ref, bb2_ref, relu=True)

    # both head branches consume the same backbone feature -> share patches.
    pf = build_patches(f)
    d = conv(pf, wd1_ref, bd1_ref, relu=True)
    s = conv(pf, ws1_ref, bs1_ref, relu=True)

    depth = conv(build_patches(d), wd2_ref, bd2_ref)        # (1, HW)
    sn = conv(build_patches(s), ws2_ref, bs2_ref)           # (3, HW)
    sn = sn * jax.lax.rsqrt(jnp.sum(sn * sn, axis=0, keepdims=True) + 1e-6)

    depth_ref[0] = depth.astype(depth_ref.dtype)
    sn_ref[0] = sn.astype(sn_ref.dtype)


def _make_tap_masks(H, W):
    """(9, 1, H*W) f32 validity masks for the 9 conv taps (tap-major order)."""
    HW = H * W
    yy, xx = np.meshgrid(np.arange(H), np.arange(W), indexing="ij")
    yy = yy.reshape(-1)
    xx = xx.reshape(-1)
    masks = np.zeros((9, 1, HW), np.float32)
    t = 0
    for dy in (-1, 0, 1):
        for dx in (-1, 0, 1):
            valid = ((yy + dy >= 0) & (yy + dy < H) &
                     (xx + dx >= 0) & (xx + dx < W))
            masks[t, 0, :] = valid.astype(np.float32)
            t += 1
    return jnp.asarray(masks)


# ----------------------------------------------------------------------------
# Deterministic parameter construction (synthetic, matches module __init__ roles)
# ----------------------------------------------------------------------------
def make_params(cin, ch, key):
    ks = jax.random.split(key, 12)

    def conv_p(kw, kb, ci, co):
        w = 0.1 * jax.random.normal(kw, (3, 3, ci, co), jnp.float32)   # HWIO
        b = 0.05 * jax.random.normal(kb, (co,), jnp.float32)
        return w, b

    return {
        "backbone_conv1": conv_p(ks[0], ks[1], cin, ch),
        "backbone_conv2": conv_p(ks[2], ks[3], ch, ch),
        "depth_conv1": conv_p(ks[4], ks[5], ch, ch),
        "depth_conv2": conv_p(ks[6], ks[7], ch, 1),
        "sn_conv1": conv_p(ks[8], ks[9], ch, 3 * 0 + 1 * 0 + ch),  # Ch->Ch
        "sn_conv2": conv_p(ks[10], ks[11], ch, 3),
    }


# ----------------------------------------------------------------------------
# DepthSnModel forward (inference path), Pallas-backed
# ----------------------------------------------------------------------------
def depth_sn_forward(batched_inputs, params):
    """batched_inputs: list of dicts with 'image' (C,H,W). Returns list of
    dicts with 'depth' (1,H,W) and 'sn' (3,H,W) -- same as the PyTorch module."""
    # ImageList.from_tensors -> stacked batch (N,C,H,W).
    rf = jnp.stack([d["image"] for d in batched_inputs], axis=0)
    rf = rf.astype(jnp.float32)
    N, C, H, W = rf.shape
    HW = H * W
    Cpad = -(-C // 8) * 8                     # sublane-align the input channels

    x = rf.reshape(N, C, HW)                  # (N, C, HW): lane axis = spatial
    if Cpad != C:
        x = jnp.pad(x, ((0, 0), (0, Cpad - C), (0, 0)))

    # Weights -> (Cout, 9*Cin) matmul form (tap-major, matching in-kernel
    # patch ordering); biases -> (Cout, 1).
    def prep(name, cin_pad=None):
        w, b = params[name]
        ci, co = w.shape[2], w.shape[3]
        if cin_pad is not None and cin_pad != ci:
            w = jnp.pad(w, ((0, 0), (0, 0), (0, cin_pad - ci), (0, 0)))
        w2 = jnp.transpose(w, (3, 0, 1, 2)).reshape(co, -1)
        return w2, b.reshape(co, 1)

    wb1, bb1 = prep("backbone_conv1", Cpad)
    wb2, bb2 = prep("backbone_conv2")
    wd1, bd1 = prep("depth_conv1")
    wd2, bd2 = prep("depth_conv2")
    ws1, bs1 = prep("sn_conv1")
    ws2, bs2 = prep("sn_conv2")

    masks = _make_tap_masks(H, W)             # (9, 1, HW)

    kernel = functools.partial(_fused_depth_sn_kernel, H=H, W=W)
    flat = [wb1, bb1, wb2, bb2, wd1, bd1, wd2, bd2, ws1, bs1, ws2, bs2]

    in_specs = (
        [pl.BlockSpec((1, Cpad, HW), lambda n: (n, 0, 0)),
         pl.BlockSpec((9, 1, HW), lambda n: (0, 0, 0))]
        + [pl.BlockSpec(p.shape, lambda n: (0, 0)) for p in flat]
    )

    depth_flat, sn_flat = pl.pallas_call(
        kernel,
        out_shape=(jax.ShapeDtypeStruct((N, 1, HW), jnp.float32),
                   jax.ShapeDtypeStruct((N, 3, HW), jnp.float32)),
        grid=(N,),
        in_specs=in_specs,
        out_specs=[pl.BlockSpec((1, 1, HW), lambda n: (n, 0, 0)),
                   pl.BlockSpec((1, 3, HW), lambda n: (n, 0, 0))],
        compiler_params=pltpu.CompilerParams(
            dimension_semantics=("parallel",)),
    )(x, masks, *flat)

    depth = depth_flat.reshape(N, 1, H, W)
    sn = sn_flat.reshape(N, 3, H, W)

    # _postprocess: list of {'depth': (1,H,W), 'sn': (3,H,W)}
    return [{"depth": depth[i], "sn": sn[i]} for i in range(N)]


# ----------------------------------------------------------------------------
# Pure-JAX reference (for correctness check of the fused Pallas kernel)
# ----------------------------------------------------------------------------
def _conv3x3_ref(x, w, b, relu=False, l2norm=False):
    y = jax.lax.conv_general_dilated(
        x, w, window_strides=(1, 1), padding="SAME",
        dimension_numbers=("NHWC", "HWIO", "NHWC"),
        precision=jax.lax.Precision.HIGHEST) + b
    if relu:
        y = jnp.maximum(y, 0.0)
    if l2norm:
        y = y * jax.lax.rsqrt(jnp.sum(y * y, axis=-1, keepdims=True) + 1e-6)
    return y


def depth_sn_forward_ref(batched_inputs, params):
    rf = jnp.stack([d["image"] for d in batched_inputs], axis=0)
    x = jnp.transpose(rf, (0, 2, 3, 1)).astype(jnp.float32)
    w, b = params["backbone_conv1"]; f = _conv3x3_ref(x, w, b, relu=True)
    w, b = params["backbone_conv2"]; f = _conv3x3_ref(f, w, b, relu=True)
    w, b = params["depth_conv1"]; d = _conv3x3_ref(f, w, b, relu=True)
    w, b = params["depth_conv2"]; depth = _conv3x3_ref(d, w, b)
    w, b = params["sn_conv1"]; s = _conv3x3_ref(f, w, b, relu=True)
    w, b = params["sn_conv2"]; sn = _conv3x3_ref(s, w, b, l2norm=True)
    return jnp.transpose(depth, (0, 3, 1, 2)), jnp.transpose(sn, (0, 3, 1, 2))


if __name__ == "__main__":
    N, C, H, W, CH = 2, 4, 16, 16, 16   # batch, in-channels, spatial, hidden

    key = jax.random.PRNGKey(0)
    k_img, k_par = jax.random.split(key)
    images = jax.random.normal(k_img, (N, C, H, W), jnp.float32)
    batched_inputs = [{"image": images[i]} for i in range(N)]

    params = make_params(C, CH, k_par)

    results = depth_sn_forward(batched_inputs, params)
    jax.block_until_ready([r["depth"] for r in results])
    jax.block_until_ready([r["sn"] for r in results])

    # sanity check against pure-JAX reference
    ref_depth, ref_sn = depth_sn_forward_ref(batched_inputs, params)
    for i, r in enumerate(results):
        assert r["depth"].shape == (1, H, W)
        assert r["sn"].shape == (3, H, W)
        assert jnp.allclose(r["depth"], ref_depth[i], atol=1e-3, rtol=1e-3)
        assert jnp.allclose(r["sn"], ref_sn[i], atol=1e-3, rtol=1e-3)

    print("KERNEL_OK")
</pallas_src>

<mosaic_0001>
module attributes {stable_mosaic.version = 11 : i64} {
  func.func @_fused_depth_sn_kernel(%arg0: i32, %arg1: memref<1x8x256xf32, #tpu.memory_space<vmem>>, %arg2: memref<9x1x256xf32, #tpu.memory_space<vmem>>, %arg3: memref<16x72xf32, #tpu.memory_space<vmem>>, %arg4: memref<16x1xf32, #tpu.memory_space<vmem>>, %arg5: memref<16x144xf32, #tpu.memory_space<vmem>>, %arg6: memref<16x1xf32, #tpu.memory_space<vmem>>, %arg7: memref<16x144xf32, #tpu.memory_space<vmem>>, %arg8: memref<16x1xf32, #tpu.memory_space<vmem>>, %arg9: memref<1x144xf32, #tpu.memory_space<vmem>>, %arg10: memref<1x1xf32, #tpu.memory_space<vmem>>, %arg11: memref<16x144xf32, #tpu.memory_space<vmem>>, %arg12: memref<16x1xf32, #tpu.memory_space<vmem>>, %arg13: memref<3x144xf32, #tpu.memory_space<vmem>>, %arg14: memref<3x1xf32, #tpu.memory_space<vmem>>, %arg15: memref<1x1x256xf32, #tpu.memory_space<vmem>>, %arg16: memref<1x3x256xf32, #tpu.memory_space<vmem>>) attributes {dimension_semantics = [#tpu.dimension_semantics<parallel>], iteration_bounds = array<i64: 2>, scalar_prefetch = 0 : i64, scratch_operands = 0 : i64, tpu.core_type = #tpu.core_type<tc>, window_params = [{transform_indices = @transform_0, window_bounds = array<i64: 1, 8, 256>}, {pipeline_mode = #tpu.pipeline_mode<synchronous>, transform_indices = @transform_1, window_bounds = array<i64: 9, 1, 256>}, {pipeline_mode = #tpu.pipeline_mode<synchronous>, transform_indices = @transform_2, window_bounds = array<i64: 16, 72>}, {pipeline_mode = #tpu.pipeline_mode<synchronous>, transform_indices = @transform_3, window_bounds = array<i64: 16, 1>}, {pipeline_mode = #tpu.pipeline_mode<synchronous>, transform_indices = @transform_4, window_bounds = array<i64: 16, 144>}, {pipeline_mode = #tpu.pipeline_mode<synchronous>, transform_indices = @transform_5, window_bounds = array<i64: 16, 1>}, {pipeline_mode = #tpu.pipeline_mode<synchronous>, transform_indices = @transform_6, window_bounds = array<i64: 16, 144>}, {pipeline_mode = #tpu.pipeline_mode<synchronous>, transform_indices = @transform_7, window_bounds = array<i64: 16, 1>}, {pipeline_mode = #tpu.pipeline_mode<synchronous>, transform_indices = @transform_8, window_bounds = array<i64: 1, 144>}, {pipeline_mode = #tpu.pipeline_mode<synchronous>, transform_indices = @transform_9, window_bounds = array<i64: 1, 1>}, {pipeline_mode = #tpu.pipeline_mode<synchronous>, transform_indices = @transform_10, window_bounds = array<i64: 16, 144>}, {pipeline_mode = #tpu.pipeline_mode<synchronous>, transform_indices = @transform_11, window_bounds = array<i64: 16, 1>}, {pipeline_mode = #tpu.pipeline_mode<synchronous>, transform_indices = @transform_12, window_bounds = array<i64: 3, 144>}, {pipeline_mode = #tpu.pipeline_mode<synchronous>, transform_indices = @transform_13, window_bounds = array<i64: 3, 1>}, {transform_indices = @transform_14, window_bounds = array<i64: 1, 1, 256>}, {transform_indices = @transform_15, window_bounds = array<i64: 1, 3, 256>}]} {
    %c0 = arith.constant 0 : index
    %c0_0 = arith.constant 0 : index
    %c0_1 = arith.constant 0 : index
    %0 = vector.load %arg1[%c0, %c0_0, %c0_1] : memref<1x8x256xf32, #tpu.memory_space<vmem>>, vector<1x8x256xf32>
    %1 = vector.shape_cast %0 : vector<1x8x256xf32> to vector<8x256xf32>
    %c17_i32 = arith.constant 17 : i32
    %2 = tpu.dynamic_rotate %1 by %c17_i32 dim 1 : vector<8x256xf32>, i32 -> vector<8x256xf32>
    %c0_2 = arith.constant 0 : index
    %c0_3 = arith.constant 0 : index
    %c0_4 = arith.constant 0 : index
    %3 = vector.load %arg2[%c0_2, %c0_3, %c0_4] : memref<9x1x256xf32, #tpu.memory_space<vmem>>, vector<1x1x256xf32>
    %4 = vector.shape_cast %3 : vector<1x1x256xf32> to vector<1x256xf32>
    %5 = vector.broadcast %4 : vector<1x256xf32> to vector<8x256xf32>
    %6 = arith.mulf %2, %5 : vector<8x256xf32>
    %c16_i32 = arith.constant 16 : i32
    %7 = tpu.dynamic_rotate %1 by %c16_i32 dim 1 : vector<8x256xf32>, i32 -> vector<8x256xf32>
    %c1 = arith.constant 1 : index
    %c0_5 = arith.constant 0 : index
    %c0_6 = arith.constant 0 : index
    %8 = vector.load %arg2[%c1, %c0_5, %c0_6] : memref<9x1x256xf32, #tpu.memory_space<vmem>>, vector<1x1x256xf32>
    %9 = vector.shape_cast %8 : vector<1x1x256xf32> to vector<1x256xf32>
    %10 = vector.broadcast %9 : vector<1x256xf32> to vector<8x256xf32>
    %11 = arith.mulf %7, %10 : vector<8x256xf32>
    %c15_i32 = arith.constant 15 : i32
    %12 = tpu.dynamic_rotate %1 by %c15_i32 dim 1 : vector<8x256xf32>, i32 -> vector<8x256xf32>
    %c2 = arith.constant 2 : index
    %c0_7 = arith.constant 0 : index
    %c0_8 = arith.constant 0 : index
    %13 = vector.load %arg2[%c2, %c0_7, %c0_8] : memref<9x1x256xf32, #tpu.memory_space<vmem>>, vector<1x1x256xf32>
    %14 = vector.shape_cast %13 : vector<1x1x256xf32> to vector<1x256xf32>
    %15 = vector.broadcast %14 : vector<1x256xf32> to vector<8x256xf32>
    %16 = arith.mulf %12, %15 : vector<8x256xf32>
    %c1_i32 = arith.constant 1 : i32
    %17 = tpu.dynamic_rotate %1 by %c1_i32 dim 1 : vector<8x256xf32>, i32 -> vector<8x256xf32>
    %c3 = arith.constant 3 : index
    %c0_9 = arith.constant 0 : index
    %c0_10 = arith.constant 0 : index
    %18 = vector.load %arg2[%c3, %c0_9, %c0_10] : memref<9x1x256xf32, #tpu.memory_space<vmem>>, vector<1x1x256xf32>
    %19 = vector.shape_cast %18 : vector<1x1x256xf32> to vector<1x256xf32>
    %20 = vector.broadcast %19 : vector<1x256xf32> to vector<8x256xf32>
    %21 = arith.mulf %17, %20 : vector<8x256xf32>
    %c255_i32 = arith.constant 255 : i32
    %22 = tpu.dynamic_rotate %1 by %c255_i32 dim 1 : vector<8x256xf32>, i32 -> vector<8x256xf32>
    %c5 = arith.constant 5 : index
    %c0_11 = arith.constant 0 : index
    %c0_12 = arith.constant 0 : index
    %23 = vector.load %arg2[%c5, %c0_11, %c0_12] : memref<9x1x256xf32, #tpu.memory_space<vmem>>, vector<1x1x256xf32>
    %24 = vector.shape_cast %23 : vector<1x1x256xf32> to vector<1x256xf32>
    %25 = vector.broadcast %24 : vector<1x256xf32> to vector<8x256xf32>
    %26 = arith.mulf %22, %25 : vector<8x256xf32>
    %c241_i32 = arith.constant 241 : i32
    %27 = tpu.dynamic_rotate %1 by %c241_i32 dim 1 : vector<8x256xf32>, i32 -> vector<8x256xf32>
    %c6 = arith.constant 6 : index
    %c0_13 = arith.constant 0 : index
    %c0_14 = arith.constant 0 : index
    %28 = vector.load %arg2[%c6, %c0_13, %c0_14] : memref<9x1x256xf32, #tpu.memory_space<vmem>>, vector<1x1x256xf32>
    %29 = vector.shape_cast %28 : vector<1x1x256xf32> to vector<1x256xf32>
    %30 = vector.broadcast %29 : vector<1x256xf32> to vector<8x256xf32>
    %31 = arith.mulf %27, %30 : vector<8x256xf32>
    %c240_i32 = arith.constant 240 : i32
    %32 = tpu.dynamic_rotate %1 by %c240_i32 dim 1 : vector<8x256xf32>, i32 -> vector<8x256xf32>
    %c7 = arith.constant 7 : index
    %c0_15 = arith.constant 0 : index
    %c0_16 = arith.constant 0 : index
    %33 = vector.load %arg2[%c7, %c0_15, %c0_16] : memref<9x1x256xf32, #tpu.memory_space<vmem>>, vector<1x1x256xf32>
    %34 = vector.shape_cast %33 : vector<1x1x256xf32> to vector<1x256xf32>
    %35 = vector.broadcast %34 : vector<1x256xf32> to vector<8x256xf32>
    %36 = arith.mulf %32, %35 : vector<8x256xf32>
    %c239_i32 = arith.constant 239 : i32
    %37 = tpu.dynamic_rotate %1 by %c239_i32 dim 1 : vector<8x256xf32>, i32 -> vector<8x256xf32>
    %c8 = arith.constant 8 : index
    %c0_17 = arith.constant 0 : index
    %c0_18 = arith.constant 0 : index
    %38 = vector.load %arg2[%c8, %c0_17, %c0_18] : memref<9x1x256xf32, #tpu.memory_space<vmem>>, vector<1x1x256xf32>
    %39 = vector.shape_cast %38 : vector<1x1x256xf32> to vector<1x256xf32>
    %40 = vector.broadcast %39 : vector<1x256xf32> to vector<8x256xf32>
    %41 = arith.mulf %37, %40 : vector<8x256xf32>
    %42 = tpu.concatenate %6, %11, %16, %21, %1, %26, %31, %36, %41 in 0 : vector<8x256xf32>, vector<8x256xf32>, vector<8x256xf32>, vector<8x256xf32>, vector<8x256xf32>, vector<8x256xf32>, vector<8x256xf32>, vector<8x256xf32>, vector<8x256xf32> -> vector<72x256xf32>
    %c0_19 = arith.constant 0 : index
    %c0_20 = arith.constant 0 : index
    %43 = vector.load %arg3[%c0_19, %c0_20] : memref<16x72xf32, #tpu.memory_space<vmem>>, vector<16x72xf32>
    %cst = arith.constant dense<0.000000e+00> : vector<16x256xf32>
    %44 = tpu.matmul %43, %42, %cst {dimension_numbers = #tpu.dot_dimension_numbers<[1], [0], [0], [1], [0, 0, 1, 1], [], []>} : vector<16x72xf32>, vector<72x256xf32>, vector<16x256xf32> -> vector<16x256xf32>
    %c0_21 = arith.constant 0 : index
    %c0_22 = arith.constant 0 : index
    %45 = vector.load %arg4[%c0_21, %c0_22] : memref<16x1xf32, #tpu.memory_space<vmem>>, vector<16x1xf32>
    %46 = vector.broadcast %45 : vector<16x1xf32> to vector<16x256xf32>
    %47 = arith.addf %44, %46 : vector<16x256xf32>
    %cst_23 = arith.constant 0.000000e+00 : f32
    %48 = vector.broadcast %cst_23 : f32 to vector<16x256xf32>
    %49 = arith.maximumf %47, %48 : vector<16x256xf32>
    %c17_i32_24 = arith.constant 17 : i32
    %50 = tpu.dynamic_rotate %49 by %c17_i32_24 dim 1 : vector<16x256xf32>, i32 -> vector<16x256xf32>
    %c0_25 = arith.constant 0 : index
    %c0_26 = arith.constant 0 : index
    %c0_27 = arith.constant 0 : index
    %51 = vector.load %arg2[%c0_25, %c0_26, %c0_27] : memref<9x1x256xf32, #tpu.memory_space<vmem>>, vector<1x1x256xf32>
    %52 = vector.shape_cast %51 : vector<1x1x256xf32> to vector<1x256xf32>
    %53 = vector.broadcast %52 : vector<1x256xf32> to vector<16x256xf32>
    %54 = arith.mulf %50, %53 : vector<16x256xf32>
    %c16_i32_28 = arith.constant 16 : i32
    %55 = tpu.dynamic_rotate %49 by %c16_i32_28 dim 1 : vector<16x256xf32>, i32 -> vector<16x256xf32>
    %c1_29 = arith.constant 1 : index
    %c0_30 = arith.constant 0 : index
    %c0_31 = arith.constant 0 : index
    %56 = vector.load %arg2[%c1_29, %c0_30, %c0_31] : memref<9x1x256xf32, #tpu.memory_space<vmem>>, vector<1x1x256xf32>
    %57 = vector.shape_cast %56 : vector<1x1x256xf32> to vector<1x256xf32>
    %58 = vector.broadcast %57 : vector<1x256xf32> to vector<16x256xf32>
    %59 = arith.mulf %55, %58 : vector<16x256xf32>
    %c15_i32_32 = arith.constant 15 : i32
    %60 = tpu.dynamic_rotate %49 by %c15_i32_32 dim 1 : vector<16x256xf32>, i32 -> vector<16x256xf32>
    %c2_33 = arith.constant 2 : index
    %c0_34 = arith.constant 0 : index
    %c0_35 = arith.constant 0 : index
    %61 = vector.load %arg2[%c2_33, %c0_34, %c0_35] : memref<9x1x256xf32, #tpu.memory_space<vmem>>, vector<1x1x256xf32>
    %62 = vector.shape_cast %61 : vector<1x1x256xf32> to vector<1x256xf32>
    %63 = vector.broadcast %62 : vector<1x256xf32> to vector<16x256xf32>
    %64 = arith.mulf %60, %63 : vector<16x256xf32>
    %c1_i32_36 = arith.constant 1 : i32
    %65 = tpu.dynamic_rotate %49 by %c1_i32_36 dim 1 : vector<16x256xf32>, i32 -> vector<16x256xf32>
    %c3_37 = arith.constant 3 : index
    %c0_38 = arith.constant 0 : index
    %c0_39 = arith.constant 0 : index
    %66 = vector.load %arg2[%c3_37, %c0_38, %c0_39] : memref<9x1x256xf32, #tpu.memory_space<vmem>>, vector<1x1x256xf32>
    %67 = vector.shape_cast %66 : vector<1x1x256xf32> to vector<1x256xf32>
    %68 = vector.broadcast %67 : vector<1x256xf32> to vector<16x256xf32>
    %69 = arith.mulf %65, %68 : vector<16x256xf32>
    %c255_i32_40 = arith.constant 255 : i32
    %70 = tpu.dynamic_rotate %49 by %c255_i32_40 dim 1 : vector<16x256xf32>, i32 -> vector<16x256xf32>
    %c5_41 = arith.constant 5 : index
    %c0_42 = arith.constant 0 : index
    %c0_43 = arith.constant 0 : index
    %71 = vector.load %arg2[%c5_41, %c0_42, %c0_43] : memref<9x1x256xf32, #tpu.memory_space<vmem>>, vector<1x1x256xf32>
    %72 = vector.shape_cast %71 : vector<1x1x256xf32> to vector<1x256xf32>
    %73 = vector.broadcast %72 : vector<1x256xf32> to vector<16x256xf32>
    %74 = arith.mulf %70, %73 : vector<16x256xf32>
    %c241_i32_44 = arith.constant 241 : i32
    %75 = tpu.dynamic_rotate %49 by %c241_i32_44 dim 1 : vector<16x256xf32>, i32 -> vector<16x256xf32>
    %c6_45 = arith.constant 6 : index
    %c0_46 = arith.constant 0 : index
    %c0_47 = arith.constant 0 : index
    %76 = vector.load %arg2[%c6_45, %c0_46, %c0_47] : memref<9x1x256xf32, #tpu.memory_space<vmem>>, vector<1x1x256xf32>
    %77 = vector.shape_cast %76 : vector<1x1x256xf32> to vector<1x256xf32>
    %78 = vector.broadcast %77 : vector<1x256xf32> to vector<16x256xf32>
    %79 = arith.mulf %75, %78 : vector<16x256xf32>
    %c240_i32_48 = arith.constant 240 : i32
    %80 = tpu.dynamic_rotate %49 by %c240_i32_48 dim 1 : vector<16x256xf32>, i32 -> vector<16x256xf32>
    %c7_49 = arith.constant 7 : index
    %c0_50 = arith.constant 0 : index
    %c0_51 = arith.constant 0 : index
    %81 = vector.load %arg2[%c7_49, %c0_50, %c0_51] : memref<9x1x256xf32, #tpu.memory_space<vmem>>, vector<1x1x256xf32>
    %82 = vector.shape_cast %81 : vector<1x1x256xf32> to vector<1x256xf32>
    %83 = vector.broadcast %82 : vector<1x256xf32> to vector<16x256xf32>
    %84 = arith.mulf %80, %83 : vector<16x256xf32>
    %c239_i32_52 = arith.constant 239 : i32
    %85 = tpu.dynamic_rotate %49 by %c239_i32_52 dim 1 : vector<16x256xf32>, i32 -> vector<16x256xf32>
    %c8_53 = arith.constant 8 : index
    %c0_54 = arith.constant 0 : index
    %c0_55 = arith.constant 0 : index
    %86 = vector.load %arg2[%c8_53, %c0_54, %c0_55] : memref<9x1x256xf32, #tpu.memory_space<vmem>>, vector<1x1x256xf32>
    %87 = vector.shape_cast %86 : vector<1x1x256xf32> to vector<1x256xf32>
    %88 = vector.broadcast %87 : vector<1x256xf32> to vector<16x256xf32>
    %89 = arith.mulf %85, %88 : vector<16x256xf32>
    %90 = tpu.concatenate %54, %59, %64, %69, %49, %74, %79, %84, %89 in 0 : vector<16x256xf32>, vector<16x256xf32>, vector<16x256xf32>, vector<16x256xf32>, vector<16x256xf32>, vector<16x256xf32>, vector<16x256xf32>, vector<16x256xf32>, vector<16x256xf32> -> vector<144x256xf32>
    %c0_56 = arith.constant 0 : index
    %c0_57 = arith.constant 0 : index
    %91 = vector.load %arg5[%c0_56, %c0_57] : memref<16x144xf32, #tpu.memory_space<vmem>>, vector<16x144xf32>
    %cst_58 = arith.constant dense<0.000000e+00> : vector<16x256xf32>
    %92 = tpu.matmul %91, %90, %cst_58 {dimension_numbers = #tpu.dot_dimension_numbers<[1], [0], [0], [1], [0, 0, 1, 1], [], []>} : vector<16x144xf32>, vector<144x256xf32>, vector<16x256xf32> -> vector<16x256xf32>
    %c0_59 = arith.constant 0 : index
    %c0_60 = arith.constant 0 : index
    %93 = vector.load %arg6[%c0_59, %c0_60] : memref<16x1xf32, #tpu.memory_space<vmem>>, vector<16x1xf32>
    %94 = vector.broadcast %93 : vector<16x1xf32> to vector<16x256xf32>
    %95 = arith.addf %92, %94 : vector<16x256xf32>
    %cst_61 = arith.constant 0.000000e+00 : f32
    %96 = vector.broadcast %cst_61 : f32 to vector<16x256xf32>
    %97 = arith.maximumf %95, %96 : vector<16x256xf32>
    %c17_i32_62 = arith.constant 17 : i32
    %98 = tpu.dynamic_rotate %97 by %c17_i32_62 dim 1 : vector<16x256xf32>, i32 -> vector<16x256xf32>
    %c0_63 = arith.constant 0 : index
    %c0_64 = arith.constant 0 : index
    %c0_65 = arith.constant 0 : index
    %99 = vector.load %arg2[%c0_63, %c0_64, %c0_65] : memref<9x1x256xf32, #tpu.memory_space<vmem>>, vector<1x1x256xf32>
    %100 = vector.shape_cast %99 : vector<1x1x256xf32> to vector<1x256xf32>
    %101 = vector.broadcast %100 : vector<1x256xf32> to vector<16x256xf32>
    %102 = arith.mulf %98, %101 : vector<16x256xf32>
    %c16_i32_66 = arith.constant 16 : i32
    %103 = tpu.dynamic_rotate %97 by %c16_i32_66 dim 1 : vector<16x256xf32>, i32 -> vector<16x256xf32>
    %c1_67 = arith.constant 1 : index
    %c0_68 = arith.constant 0 : index
    %c0_69 = arith.constant 0 : index
    %104 = vector.load %arg2[%c1_67, %c0_68, %c0_69] : memref<9x1x256xf32, #tpu.memory_space<vmem>>, vector<1x1x256xf32>
    %105 = vector.shape_cast %104 : vector<1x1x256xf32> to vector<1x256xf32>
    %106 = vector.broadcast %105 : vector<1x256xf32> to vector<16x256xf32>
    %107 = arith.mulf %103, %106 : vector<16x256xf32>
    %c15_i32_70 = arith.constant 15 : i32
    %108 = tpu.dynamic_rotate %97 by %c15_i32_70 dim 1 : vector<16x256xf32>, i32 -> vector<16x256xf32>
    %c2_71 = arith.constant 2 : index
    %c0_72 = arith.constant 0 : index
    %c0_73 = arith.constant 0 : index
    %109 = vector.load %arg2[%c2_71, %c0_72, %c0_73] : memref<9x1x256xf32, #tpu.memory_space<vmem>>, vector<1x1x256xf32>
    %110 = vector.shape_cast %109 : vector<1x1x256xf32> to vector<1x256xf32>
    %111 = vector.broadcast %110 : vector<1x256xf32> to vector<16x256xf32>
    %112 = arith.mulf %108, %111 : vector<16x256xf32>
    %c1_i32_74 = arith.constant 1 : i32
    %113 = tpu.dynamic_rotate %97 by %c1_i32_74 dim 1 : vector<16x256xf32>, i32 -> vector<16x256xf32>
    %c3_75 = arith.constant 3 : index
    %c0_76 = arith.constant 0 : index
    %c0_77 = arith.constant 0 : index
    %114 = vector.load %arg2[%c3_75, %c0_76, %c0_77] : memref<9x1x256xf32, #tpu.memory_space<vmem>>, vector<1x1x256xf32>
    %115 = vector.shape_cast %114 : vector<1x1x256xf32> to vector<1x256xf32>
    %116 = vector.broadcast %115 : vector<1x256xf32> to vector<16x256xf32>
    %117 = arith.mulf %113, %116 : vector<16x256xf32>
    %c255_i32_78 = arith.constant 255 : i32
    %118 = tpu.dynamic_rotate %97 by %c255_i32_78 dim 1 : vector<16x256xf32>, i32 -> vector<16x256xf32>
    %c5_79 = arith.constant 5 : index
    %c0_80 = arith.constant 0 : index
    %c0_81 = arith.constant 0 : index
    %119 = vector.load %arg2[%c5_79, %c0_80, %c0_81] : memref<9x1x256xf32, #tpu.memory_space<vmem>>, vector<1x1x256xf32>
    %120 = vector.shape_cast %119 : vector<1x1x256xf32> to vector<1x256xf32>
    %121 = vector.broadcast %120 : vector<1x256xf32> to vector<16x256xf32>
    %122 = arith.mulf %118, %121 : vector<16x256xf32>
    %c241_i32_82 = arith.constant 241 : i32
    %123 = tpu.dynamic_rotate %97 by %c241_i32_82 dim 1 : vector<16x256xf32>, i32 -> vector<16x256xf32>
    %c6_83 = arith.constant 6 : index
    %c0_84 = arith.constant 0 : index
    %c0_85 = arith.constant 0 : index
    %124 = vector.load %arg2[%c6_83, %c0_84, %c0_85] : memref<9x1x256xf32, #tpu.memory_space<vmem>>, vector<1x1x256xf32>
    %125 = vector.shape_cast %124 : vector<1x1x256xf32> to vector<1x256xf32>
    %126 = vector.broadcast %125 : vector<1x256xf32> to vector<16x256xf32>
    %127 = arith.mulf %123, %126 : vector<16x256xf32>
    %c240_i32_86 = arith.constant 240 : i32
    %128 = tpu.dynamic_rotate %97 by %c240_i32_86 dim 1 : vector<16x256xf32>, i32 -> vector<16x256xf32>
    %c7_87 = arith.constant 7 : index
    %c0_88 = arith.constant 0 : index
    %c0_89 = arith.constant 0 : index
    %129 = vector.load %arg2[%c7_87, %c0_88, %c0_89] : memref<9x1x256xf32, #tpu.memory_space<vmem>>, vector<1x1x256xf32>
    %130 = vector.shape_cast %129 : vector<1x1x256xf32> to vector<1x256xf32>
    %131 = vector.broadcast %130 : vector<1x256xf32> to vector<16x256xf32>
    %132 = arith.mulf %128, %131 : vector<16x256xf32>
    %c239_i32_90 = arith.constant 239 : i32
    %133 = tpu.dynamic_rotate %97 by %c239_i32_90 dim 1 : vector<16x256xf32>, i32 -> vector<16x256xf32>
    %c8_91 = arith.constant 8 : index
    %c0_92 = arith.constant 0 : index
    %c0_93 = arith.constant 0 : index
    %134 = vector.load %arg2[%c8_91, %c0_92, %c0_93] : memref<9x1x256xf32, #tpu.memory_space<vmem>>, vector<1x1x256xf32>
    %135 = vector.shape_cast %134 : vector<1x1x256xf32> to vector<1x256xf32>
    %136 = vector.broadcast %135 : vector<1x256xf32> to vector<16x256xf32>
    %137 = arith.mulf %133, %136 : vector<16x256xf32>
    %138 = tpu.concatenate %102, %107, %112, %117, %97, %122, %127, %132, %137 in 0 : vector<16x256xf32>, vector<16x256xf32>, vector<16x256xf32>, vector<16x256xf32>, vector<16x256xf32>, vector<16x256xf32>, vector<16x256xf32>, vector<16x256xf32>, vector<16x256xf32> -> vector<144x256xf32>
    %c0_94 = arith.constant 0 : index
    %c0_95 = arith.constant 0 : index
    %139 = vector.load %arg7[%c0_94, %c0_95] : memref<16x144xf32, #tpu.memory_space<vmem>>, vector<16x144xf32>
    %cst_96 = arith.constant dense<0.000000e+00> : vector<16x256xf32>
    %140 = tpu.matmul %139, %138, %cst_96 {dimension_numbers = #tpu.dot_dimension_numbers<[1], [0], [0], [1], [0, 0, 1, 1], [], []>} : vector<16x144xf32>, vector<144x256xf32>, vector<16x256xf32> -> vector<16x256xf32>
    %c0_97 = arith.constant 0 : index
    %c0_98 = arith.constant 0 : index
    %141 = vector.load %arg8[%c0_97, %c0_98] : memref<16x1xf32, #tpu.memory_space<vmem>>, vector<16x1xf32>
    %142 = vector.broadcast %141 : vector<16x1xf32> to vector<16x256xf32>
    %143 = arith.addf %140, %142 : vector<16x256xf32>
    %cst_99 = arith.constant 0.000000e+00 : f32
    %144 = vector.broadcast %cst_99 : f32 to vector<16x256xf32>
    %145 = arith.maximumf %143, %144 : vector<16x256xf32>
    %c0_100 = arith.constant 0 : index
    %c0_101 = arith.constant 0 : index
    %146 = vector.load %arg11[%c0_100, %c0_101] : memref<16x144xf32, #tpu.memory_space<vmem>>, vector<16x144xf32>
    %cst_102 = arith.constant dense<0.000000e+00> : vector<16x256xf32>
    %147 = tpu.matmul %146, %138, %cst_102 {dimension_numbers = #tpu.dot_dimension_numbers<[1], [0], [0], [1], [0, 0, 1, 1], [], []>} : vector<16x144xf32>, vector<144x256xf32>, vector<16x256xf32> -> vector<16x256xf32>
    %c0_103 = arith.constant 0 : index
    %c0_104 = arith.constant 0 : index
    %148 = vector.load %arg12[%c0_103, %c0_104] : memref<16x1xf32, #tpu.memory_space<vmem>>, vector<16x1xf32>
    %149 = vector.broadcast %148 : vector<16x1xf32> to vector<16x256xf32>
    %150 = arith.addf %147, %149 : vector<16x256xf32>
    %cst_105 = arith.constant 0.000000e+00 : f32
    %151 = vector.broadcast %cst_105 : f32 to vector<16x256xf32>
    %152 = arith.maximumf %150, %151 : vector<16x256xf32>
    %c17_i32_106 = arith.constant 17 : i32
    %153 = tpu.dynamic_rotate %145 by %c17_i32_106 dim 1 : vector<16x256xf32>, i32 -> vector<16x256xf32>
    %c0_107 = arith.constant 0 : index
    %c0_108 = arith.constant 0 : index
    %c0_109 = arith.constant 0 : index
    %154 = vector.load %arg2[%c0_107, %c0_108, %c0_109] : memref<9x1x256xf32, #tpu.memory_space<vmem>>, vector<1x1x256xf32>
    %155 = vector.shape_cast %154 : vector<1x1x256xf32> to vector<1x256xf32>
    %156 = vector.broadcast %155 : vector<1x256xf32> to vector<16x256xf32>
    %157 = arith.mulf %153, %156 : vector<16x256xf32>
    %c16_i32_110 = arith.constant 16 : i32
    %158 = tpu.dynamic_rotate %145 by %c16_i32_110 dim 1 : vector<16x256xf32>, i32 -> vector<16x256xf32>
    %c1_111 = arith.constant 1 : index
    %c0_112 = arith.constant 0 : index
    %c0_113 = arith.constant 0 : index
    %159 = vector.load %arg2[%c1_111, %c0_112, %c0_113] : memref<9x1x256xf32, #tpu.memory_space<vmem>>, vector<1x1x256xf32>
    %160 = vector.shape_cast %159 : vector<1x1x256xf32> to vector<1x256xf32>
    %161 = vector.broadcast %160 : vector<1x256xf32> to vector<16x256xf32>
    %162 = arith.mulf %158, %161 : vector<16x256xf32>
    %c15_i32_114 = arith.constant 15 : i32
    %163 = tpu.dynamic_rotate %145 by %c15_i32_114 dim 1 : vector<16x256xf32>, i32 -> vector<16x256xf32>
    %c2_115 = arith.constant 2 : index
    %c0_116 = arith.constant 0 : index
    %c0_117 = arith.constant 0 : index
    %164 = vector.load %arg2[%c2_115, %c0_116, %c0_117] : memref<9x1x256xf32, #tpu.memory_space<vmem>>, vector<1x1x256xf32>
    %165 = vector.shape_cast %164 : vector<1x1x256xf32> to vector<1x256xf32>
    %166 = vector.broadcast %165 : vector<1x256xf32> to vector<16x256xf32>
    %167 = arith.mulf %163, %166 : vector<16x256xf32>
    %c1_i32_118 = arith.constant 1 : i32
    %168 = tpu.dynamic_rotate %145 by %c1_i32_118 dim 1 : vector<16x256xf32>, i32 -> vector<16x256xf32>
    %c3_119 = arith.constant 3 : index
    %c0_120 = arith.constant 0 : index
    %c0_121 = arith.constant 0 : index
    %169 = vector.load %arg2[%c3_119, %c0_120, %c0_121] : memref<9x1x256xf32, #tpu.memory_space<vmem>>, vector<1x1x256xf32>
    %170 = vector.shape_cast %169 : vector<1x1x256xf32> to vector<1x256xf32>
    %171 = vector.broadcast %170 : vector<1x256xf32> to vector<16x256xf32>
    %172 = arith.mulf %168, %171 : vector<16x256xf32>
    %c255_i32_122 = arith.constant 255 : i32
    %173 = tpu.dynamic_rotate %145 by %c255_i32_122 dim 1 : vector<16x256xf32>, i32 -> vector<16x256xf32>
    %c5_123 = arith.constant 5 : index
    %c0_124 = arith.constant 0 : index
    %c0_125 = arith.constant 0 : index
    %174 = vector.load %arg2[%c5_123, %c0_124, %c0_125] : memref<9x1x256xf32, #tpu.memory_space<vmem>>, vector<1x1x256xf32>
    %175 = vector.shape_cast %174 : vector<1x1x256xf32> to vector<1x256xf32>
    %176 = vector.broadcast %175 : vector<1x256xf32> to vector<16x256xf32>
    %177 = arith.mulf %173, %176 : vector<16x256xf32>
    %c241_i32_126 = arith.constant 241 : i32
    %178 = tpu.dynamic_rotate %145 by %c241_i32_126 dim 1 : vector<16x256xf32>, i32 -> vector<16x256xf32>
    %c6_127 = arith.constant 6 : index
    %c0_128 = arith.constant 0 : index
    %c0_129 = arith.constant 0 : index
    %179 = vector.load %arg2[%c6_127, %c0_128, %c0_129] : memref<9x1x256xf32, #tpu.memory_space<vmem>>, vector<1x1x256xf32>
    %180 = vector.shape_cast %179 : vector<1x1x256xf32> to vector<1x256xf32>
    %181 = vector.broadcast %180 : vector<1x256xf32> to vector<16x256xf32>
    %182 = arith.mulf %178, %181 : vector<16x256xf32>
    %c240_i32_130 = arith.constant 240 : i32
    %183 = tpu.dynamic_rotate %145 by %c240_i32_130 dim 1 : vector<16x256xf32>, i32 -> vector<16x256xf32>
    %c7_131 = arith.constant 7 : index
    %c0_132 = arith.constant 0 : index
    %c0_133 = arith.constant 0 : index
    %184 = vector.load %arg2[%c7_131, %c0_132, %c0_133] : memref<9x1x256xf32, #tpu.memory_space<vmem>>, vector<1x1x256xf32>
    %185 = vector.shape_cast %184 : vector<1x1x256xf32> to vector<1x256xf32>
    %186 = vector.broadcast %185 : vector<1x256xf32> to vector<16x256xf32>
    %187 = arith.mulf %183, %186 : vector<16x256xf32>
    %c239_i32_134 = arith.constant 239 : i32
    %188 = tpu.dynamic_rotate %145 by %c239_i32_134 dim 1 : vector<16x256xf32>, i32 -> vector<16x256xf32>
    %c8_135 = arith.constant 8 : index
    %c0_136 = arith.constant 0 : index
    %c0_137 = arith.constant 0 : index
    %189 = vector.load %arg2[%c8_135, %c0_136, %c0_137] : memref<9x1x256xf32, #tpu.memory_space<vmem>>, vector<1x1x256xf32>
    %190 = vector.shape_cast %189 : vector<1x1x256xf32> to vector<1x256xf32>
    %191 = vector.broadcast %190 : vector<1x256xf32> to vector<16x256xf32>
    %192 = arith.mulf %188, %191 : vector<16x256xf32>
    %193 = tpu.concatenate %157, %162, %167, %172, %145, %177, %182, %187, %192 in 0 : vector<16x256xf32>, vector<16x256xf32>, vector<16x256xf32>, vector<16x256xf32>, vector<16x256xf32>, vector<16x256xf32>, vector<16x256xf32>, vector<16x256xf32>, vector<16x256xf32> -> vector<144x256xf32>
    %c0_138 = arith.constant 0 : index
    %c0_139 = arith.constant 0 : index
    %194 = vector.load %arg9[%c0_138, %c0_139] : memref<1x144xf32, #tpu.memory_space<vmem>>, vector<1x144xf32>
    %cst_140 = arith.constant dense<0.000000e+00> : vector<1x256xf32>
    %195 = tpu.matmul %194, %193, %cst_140 {dimension_numbers = #tpu.dot_dimension_numbers<[1], [0], [0], [1], [0, 0, 1, 1], [], []>} : vector<1x144xf32>, vector<144x256xf32>, vector<1x256xf32> -> vector<1x256xf32>
    %c0_141 = arith.constant 0 : index
    %c0_142 = arith.constant 0 : index
    %196 = vector.load %arg10[%c0_141, %c0_142] : memref<1x1xf32, #tpu.memory_space<vmem>>, vector<1x1xf32>
    %197 = vector.broadcast %196 : vector<1x1xf32> to vector<1x256xf32>
    %198 = arith.addf %195, %197 : vector<1x256xf32>
    %c17_i32_143 = arith.constant 17 : i32
    %199 = tpu.dynamic_rotate %152 by %c17_i32_143 dim 1 : vector<16x256xf32>, i32 -> vector<16x256xf32>
    %c0_144 = arith.constant 0 : index
    %c0_145 = arith.constant 0 : index
    %c0_146 = arith.constant 0 : index
    %200 = vector.load %arg2[%c0_144, %c0_145, %c0_146] : memref<9x1x256xf32, #tpu.memory_space<vmem>>, vector<1x1x256xf32>
    %201 = vector.shape_cast %200 : vector<1x1x256xf32> to vector<1x256xf32>
    %202 = vector.broadcast %201 : vector<1x256xf32> to vector<16x256xf32>
    %203 = arith.mulf %199, %202 : vector<16x256xf32>
    %c16_i32_147 = arith.constant 16 : i32
    %204 = tpu.dynamic_rotate %152 by %c16_i32_147 dim 1 : vector<16x256xf32>, i32 -> vector<16x256xf32>
    %c1_148 = arith.constant 1 : index
    %c0_149 = arith.constant 0 : index
    %c0_150 = arith.constant 0 : index
    %205 = vector.load %arg2[%c1_148, %c0_149, %c0_150] : memref<9x1x256xf32, #tpu.memory_space<vmem>>, vector<1x1x256xf32>
    %206 = vector.shape_cast %205 : vector<1x1x256xf32> to vector<1x256xf32>
    %207 = vector.broadcast %206 : vector<1x256xf32> to vector<16x256xf32>
    %208 = arith.mulf %204, %207 : vector<16x256xf32>
    %c15_i32_151 = arith.constant 15 : i32
    %209 = tpu.dynamic_rotate %152 by %c15_i32_151 dim 1 : vector<16x256xf32>, i32 -> vector<16x256xf32>
    %c2_152 = arith.constant 2 : index
    %c0_153 = arith.constant 0 : index
    %c0_154 = arith.constant 0 : index
    %210 = vector.load %arg2[%c2_152, %c0_153, %c0_154] : memref<9x1x256xf32, #tpu.memory_space<vmem>>, vector<1x1x256xf32>
    %211 = vector.shape_cast %210 : vector<1x1x256xf32> to vector<1x256xf32>
    %212 = vector.broadcast %211 : vector<1x256xf32> to vector<16x256xf32>
    %213 = arith.mulf %209, %212 : vector<16x256xf32>
    %c1_i32_155 = arith.constant 1 : i32
    %214 = tpu.dynamic_rotate %152 by %c1_i32_155 dim 1 : vector<16x256xf32>, i32 -> vector<16x256xf32>
    %c3_156 = arith.constant 3 : index
    %c0_157 = arith.constant 0 : index
    %c0_158 = arith.constant 0 : index
    %215 = vector.load %arg2[%c3_156, %c0_157, %c0_158] : memref<9x1x256xf32, #tpu.memory_space<vmem>>, vector<1x1x256xf32>
    %216 = vector.shape_cast %215 : vector<1x1x256xf32> to vector<1x256xf32>
    %217 = vector.broadcast %216 : vector<1x256xf32> to vector<16x256xf32>
    %218 = arith.mulf %214, %217 : vector<16x256xf32>
    %c255_i32_159 = arith.constant 255 : i32
    %219 = tpu.dynamic_rotate %152 by %c255_i32_159 dim 1 : vector<16x256xf32>, i32 -> vector<16x256xf32>
    %c5_160 = arith.constant 5 : index
    %c0_161 = arith.constant 0 : index
    %c0_162 = arith.constant 0 : index
    %220 = vector.load %arg2[%c5_160, %c0_161, %c0_162] : memref<9x1x256xf32, #tpu.memory_space<vmem>>, vector<1x1x256xf32>
    %221 = vector.shape_cast %220 : vector<1x1x256xf32> to vector<1x256xf32>
    %222 = vector.broadcast %221 : vector<1x256xf32> to vector<16x256xf32>
    %223 = arith.mulf %219, %222 : vector<16x256xf32>
    %c241_i32_163 = arith.constant 241 : i32
    %224 = tpu.dynamic_rotate %152 by %c241_i32_163 dim 1 : vector<16x256xf32>, i32 -> vector<16x256xf32>
    %c6_164 = arith.constant 6 : index
    %c0_165 = arith.constant 0 : index
    %c0_166 = arith.constant 0 : index
    %225 = vector.load %arg2[%c6_164, %c0_165, %c0_166] : memref<9x1x256xf32, #tpu.memory_space<vmem>>, vector<1x1x256xf32>
    %226 = vector.shape_cast %225 : vector<1x1x256xf32> to vector<1x256xf32>
    %227 = vector.broadcast %226 : vector<1x256xf32> to vector<16x256xf32>
    %228 = arith.mulf %224, %227 : vector<16x256xf32>
    %c240_i32_167 = arith.constant 240 : i32
    %229 = tpu.dynamic_rotate %152 by %c240_i32_167 dim 1 : vector<16x256xf32>, i32 -> vector<16x256xf32>
    %c7_168 = arith.constant 7 : index
    %c0_169 = arith.constant 0 : index
    %c0_170 = arith.constant 0 : index
    %230 = vector.load %arg2[%c7_168, %c0_169, %c0_170] : memref<9x1x256xf32, #tpu.memory_space<vmem>>, vector<1x1x256xf32>
    %231 = vector.shape_cast %230 : vector<1x1x256xf32> to vector<1x256xf32>
    %232 = vector.broadcast %231 : vector<1x256xf32> to vector<16x256xf32>
    %233 = arith.mulf %229, %232 : vector<16x256xf32>
    %c239_i32_171 = arith.constant 239 : i32
    %234 = tpu.dynamic_rotate %152 by %c239_i32_171 dim 1 : vector<16x256xf32>, i32 -> vector<16x256xf32>
    %c8_172 = arith.constant 8 : index
    %c0_173 = arith.constant 0 : index
    %c0_174 = arith.constant 0 : index
    %235 = vector.load %arg2[%c8_172, %c0_173, %c0_174] : memref<9x1x256xf32, #tpu.memory_space<vmem>>, vector<1x1x256xf32>
    %236 = vector.shape_cast %235 : vector<1x1x256xf32> to vector<1x256xf32>
    %237 = vector.broadcast %236 : vector<1x256xf32> to vector<16x256xf32>
    %238 = arith.mulf %234, %237 : vector<16x256xf32>
    %239 = tpu.concatenate %203, %208, %213, %218, %152, %223, %228, %233, %238 in 0 : vector<16x256xf32>, vector<16x256xf32>, vector<16x256xf32>, vector<16x256xf32>, vector<16x256xf32>, vector<16x256xf32>, vector<16x256xf32>, vector<16x256xf32>, vector<16x256xf32> -> vector<144x256xf32>
    %c0_175 = arith.constant 0 : index
    %c0_176 = arith.constant 0 : index
    %240 = vector.load %arg13[%c0_175, %c0_176] : memref<3x144xf32, #tpu.memory_space<vmem>>, vector<3x144xf32>
    %cst_177 = arith.constant dense<0.000000e+00> : vector<3x256xf32>
    %241 = tpu.matmul %240, %239, %cst_177 {dimension_numbers = #tpu.dot_dimension_numbers<[1], [0], [0], [1], [0, 0, 1, 1], [], []>} : vector<3x144xf32>, vector<144x256xf32>, vector<3x256xf32> -> vector<3x256xf32>
    %c0_178 = arith.constant 0 : index
    %c0_179 = arith.constant 0 : index
    %242 = vector.load %arg14[%c0_178, %c0_179] : memref<3x1xf32, #tpu.memory_space<vmem>>, vector<3x1xf32>
    %243 = vector.broadcast %242 : vector<3x1xf32> to vector<3x256xf32>
    %244 = arith.addf %241, %243 : vector<3x256xf32>
    %245 = arith.mulf %244, %244 : vector<3x256xf32>
    %cst_180 = arith.constant dense<0.000000e+00> : vector<256xf32>
    %246 = vector.multi_reduction <add>, %245, %cst_180 [0] : vector<3x256xf32> to vector<256xf32>
    %247 = vector.shape_cast %246 : vector<256xf32> to vector<1x256xf32>
    %cst_181 = arith.constant 9.99999997E-7 : f32
    %248 = vector.broadcast %cst_181 : f32 to vector<1x256xf32>
    %249 = arith.addf %247, %248 : vector<1x256xf32>
    %250 = math.rsqrt %249 : vector<1x256xf32>
    %251 = vector.broadcast %250 : vector<1x256xf32> to vector<3x256xf32>
    %252 = arith.mulf %244, %251 : vector<3x256xf32>
    %c0_182 = arith.constant 0 : index
    %c0_183 = arith.constant 0 : index
    %c0_184 = arith.constant 0 : index
    %253 = vector.load %arg15[%c0_182, %c0_183, %c0_184] : memref<1x1x256xf32, #tpu.memory_space<vmem>>, vector<1x1x256xf32>
    %254 = vector.shape_cast %253 : vector<1x1x256xf32> to vector<1x256xf32>
    %255 = vector.shape_cast %198 : vector<1x256xf32> to vector<1x1x256xf32>
    tpu.vector_store %arg15[%c0_182, %c0_183, %c0_184], %255 {strides = array<i32>} : memref<1x1x256xf32, #tpu.memory_space<vmem>>, vector<1x1x256xf32>,
    %c0_185 = arith.constant 0 : index
    %c0_186 = arith.constant 0 : index
    %c0_187 = arith.constant 0 : index
    %256 = vector.load %arg16[%c0_185, %c0_186, %c0_187] : memref<1x3x256xf32, #tpu.memory_space<vmem>>, vector<1x3x256xf32>
    %257 = vector.shape_cast %256 : vector<1x3x256xf32> to vector<3x256xf32>
    %258 = vector.shape_cast %252 : vector<3x256xf32> to vector<1x3x256xf32>
    tpu.vector_store %arg16[%c0_185, %c0_186, %c0_187], %258 {strides = array<i32>} : memref<1x3x256xf32, #tpu.memory_space<vmem>>, vector<1x3x256xf32>,
    return
  }
  func.func @transform_0(%arg0: i32) -> (i32, i32, i32) {
    %c0_i32 = arith.constant 0 : i32
    %c0_i32_0 = arith.constant 0 : i32
    %c0_i32_1 = arith.constant 0 : i32
    return %arg0, %c0_i32, %c0_i32_0 : i32, i32, i32
  }
  func.func @transform_1(%arg0: i32) -> (i32, i32, i32) {
    %c0_i32 = arith.constant 0 : i32
    %c0_i32_0 = arith.constant 0 : i32
    %c0_i32_1 = arith.constant 0 : i32
    %c0_i32_2 = arith.constant 0 : i32
    return %c0_i32, %c0_i32_0, %c0_i32_1 : i32, i32, i32
  }
  func.func @transform_2(%arg0: i32) -> (i32, i32) {
    %c0_i32 = arith.constant 0 : i32
    %c0_i32_0 = arith.constant 0 : i32
    %c0_i32_1 = arith.constant 0 : i32
    return %c0_i32, %c0_i32_0 : i32, i32
  }
  func.func @transform_3(%arg0: i32) -> (i32, i32) {
    %c0_i32 = arith.constant 0 : i32
    %c0_i32_0 = arith.constant 0 : i32
    %c0_i32_1 = arith.constant 0 : i32
    return %c0_i32, %c0_i32_0 : i32, i32
  }
  func.func @transform_4(%arg0: i32) -> (i32, i32) {
    %c0_i32 = arith.constant 0 : i32
    %c0_i32_0 = arith.constant 0 : i32
    %c0_i32_1 = arith.constant 0 : i32
    return %c0_i32, %c0_i32_0 : i32, i32
  }
  func.func @transform_5(%arg0: i32) -> (i32, i32) {
    %c0_i32 = arith.constant 0 : i32
    %c0_i32_0 = arith.constant 0 : i32
    %c0_i32_1 = arith.constant 0 : i32
    return %c0_i32, %c0_i32_0 : i32, i32
  }
  func.func @transform_6(%arg0: i32) -> (i32, i32) {
    %c0_i32 = arith.constant 0 : i32
    %c0_i32_0 = arith.constant 0 : i32
    %c0_i32_1 = arith.constant 0 : i32
    return %c0_i32, %c0_i32_0 : i32, i32
  }
  func.func @transform_7(%arg0: i32) -> (i32, i32) {
    %c0_i32 = arith.constant 0 : i32
    %c0_i32_0 = arith.constant 0 : i32
    %c0_i32_1 = arith.constant 0 : i32
    return %c0_i32, %c0_i32_0 : i32, i32
  }
  func.func @transform_8(%arg0: i32) -> (i32, i32) {
    %c0_i32 = arith.constant 0 : i32
    %c0_i32_0 = arith.constant 0 : i32
    %c0_i32_1 = arith.constant 0 : i32
    return %c0_i32, %c0_i32_0 : i32, i32
  }
  func.func @transform_9(%arg0: i32) -> (i32, i32) {
    %c0_i32 = arith.constant 0 : i32
    %c0_i32_0 = arith.constant 0 : i32
    %c0_i32_1 = arith.constant 0 : i32
    return %c0_i32, %c0_i32_0 : i32, i32
  }
  func.func @transform_10(%arg0: i32) -> (i32, i32) {
    %c0_i32 = arith.constant 0 : i32
    %c0_i32_0 = arith.constant 0 : i32
    %c0_i32_1 = arith.constant 0 : i32
    return %c0_i32, %c0_i32_0 : i32, i32
  }
  func.func @transform_11(%arg0: i32) -> (i32, i32) {
    %c0_i32 = arith.constant 0 : i32
    %c0_i32_0 = arith.constant 0 : i32
    %c0_i32_1 = arith.constant 0 : i32
    return %c0_i32, %c0_i32_0 : i32, i32
  }
  func.func @transform_12(%arg0: i32) -> (i32, i32) {
    %c0_i32 = arith.constant 0 : i32
    %c0_i32_0 = arith.constant 0 : i32
    %c0_i32_1 = arith.constant 0 : i32
    return %c0_i32, %c0_i32_0 : i32, i32
  }
  func.func @transform_13(%arg0: i32) -> (i32, i32) {
    %c0_i32 = arith.constant 0 : i32
    %c0_i32_0 = arith.constant 0 : i32
    %c0_i32_1 = arith.constant 0 : i32
    return %c0_i32, %c0_i32_0 : i32, i32
  }
  func.func @transform_14(%arg0: i32) -> (i32, i32, i32) {
    %c0_i32 = arith.constant 0 : i32
    %c0_i32_0 = arith.constant 0 : i32
    %c0_i32_1 = arith.constant 0 : i32
    return %arg0, %c0_i32, %c0_i32_0 : i32, i32, i32
  }
  func.func @transform_15(%arg0: i32) -> (i32, i32, i32) {
    %c0_i32 = arith.constant 0 : i32
    %c0_i32_0 = arith.constant 0 : i32
    %c0_i32_1 = arith.constant 0 : i32
    return %arg0, %c0_i32, %c0_i32_0 : i32, i32, i32
  }
}

</mosaic_0001>

<llo_original>
// kernel: tpu_custom_call.1
$region0: #{tpu_custom_call.1}
  #allocation0 [shape = 'u32[]', space=smem, size = 0x4, offset = 0x4, fixed_abs, tag = 'smem constant byte address 0x4 - core index']
  #allocation1 [shape = 'u32[72,128]{1,0:T(1,128)}', space=vmem, size = 0x9000, scoped, tag = 'internal scratch']
  #allocation2 [shape = 'f32[1,1]{1,0:T(1,128)S(1)}', space=vmem, size = 0x200, scoped, tag = 'scoped memory for tpu_custom_call.1']
  %s0 = inlined_call_operand.vmem [shape: f32[2,8,256], index: 0, kind: input, shape index: {}]
  %s1 = inlined_call_operand.hbm [shape: f32[9,1,256], index: 1, kind: input, shape index: {}]
  %s2 = inlined_call_operand.hbm [shape: f32[16,72], index: 2, kind: input, shape index: {}]
  %s3 = inlined_call_operand.vmem [shape: f32[16,1], index: 3, kind: input, shape index: {}]
  %s4 = inlined_call_operand.vmem [shape: f32[16,144], index: 4, kind: input, shape index: {}]
  %s5 = inlined_call_operand.vmem [shape: f32[16,1], index: 5, kind: input, shape index: {}]
  %s6 = inlined_call_operand.hbm [shape: f32[16,144], index: 6, kind: input, shape index: {}]
  %s7 = inlined_call_operand.vmem [shape: f32[16,1], index: 7, kind: input, shape index: {}]
  %s8 = inlined_call_operand.vmem [shape: f32[1,144], index: 8, kind: input, shape index: {}]
  %s9 = inlined_call_operand.<no memory space> [shape: f32[1,1], index: 9, kind: input, shape index: {}]
  %s10 = inlined_call_operand.hbm [shape: f32[16,144], index: 10, kind: input, shape index: {}]
  %s11 = inlined_call_operand.vmem [shape: f32[16,1], index: 11, kind: input, shape index: {}]
  %s12 = inlined_call_operand.vmem [shape: f32[3,144], index: 12, kind: input, shape index: {}]
  %s13 = inlined_call_operand.vmem [shape: f32[3,1], index: 13, kind: input, shape index: {}]
  %s14 = inlined_call_operand.hbm [shape: f32[2,1,256], index: 14, kind: output, shape index: {0}]
  %s15 = inlined_call_operand.vmem [shape: f32[2,3,256], index: 15, kind: output, shape index: {1}]
  %16 = xla_tuple %s14, %s15
  %s17 = sld [smem:[#allocation0]]
  $region113: #{tpu_custom_call.1} parent=0
    _
  %s19 = ssub.s32 1, %s17
  %s20 = scalar_select 0, %s19, %s17
  %v21 = vstv %s9
  %22 = vst [vmem:[#allocation2] sm:$0x1] %v21
  $region1: #{tpu_custom_call.1} parent=0
    #allocation3 [shape = 'u8[9216]{0}', space=vmem, size = 0x2400, scoped, tag = 'input window, operand 1, single buffered']
    #allocation4 [shape = 's32[2]{0}', space=sflag, size = 0x8, scoped, tag = 'scoped memory for tpu_custom_call.1']
    #allocation5 [shape = 's32[2]{0}', space=sflag, size = 0x8, scoped, tag = 'scoped memory for tpu_custom_call.1']
    #allocation6 [shape = 'u8[8192]{0}', space=vmem, size = 0x2000, scoped, tag = 'input window, operand 2, single buffered']
    #allocation7 [shape = 's32[1]{0}', space=sflag, size = 0x4, scoped, tag = 'scoped memory for tpu_custom_call.1']
    #allocation8 [shape = 'u8[16384]{0}', space=vmem, size = 0x4000, scoped, tag = 'input window, operand 6, single buffered']
    #allocation9 [shape = 'u8[16384]{0}', space=vmem, size = 0x4000, scoped, tag = 'input window, operand 10, single buffered']
    #allocation10 [shape = 's32[1]{0}', space=sflag, size = 0x4, scoped, tag = 'scoped memory for tpu_custom_call.1']
    #allocation11 [shape = 'u8[2048]{0}', space=vmem, size = 0x800, scoped, tag = 'output window, operand 0']
    %23 = vsyncpa [#allocation4], 0
    %24 = vsyncpa [#allocation7], 0
    %25 = vsyncpa [#allocation10], 0
    %26 = vsyncpa [#allocation5], 0
    %s27 = scalar_lea.sflag [#allocation5], 1
    %28 = vsyncpa %s27, 0
    loop: start=0, step=1, limit=4
    $region2: #{tpu_custom_call.1} parent=1 // loop_pre_header
      _
    $region3: #{tpu_custom_call.1} parent=1 // loop_header
      %s30 = sphi 0, %s34
      %p31 = scmp.ge.s32.totalorder %s30, 4
      %s40 = sphi 0, %s42
      %s43 = sphi 0, %s40
      %s44 = sphi 0, %s43
      %s60 = sphi 0, %s44
      %s64 = sphi 0, %s64
      %s66 = sphi 0, %s64
      %s67 = sphi 0, %s66
      %s81 = sphi 0, %s67
      %s85 = sphi 0, %s85
      %s87 = sphi 0, %s85
      %s88 = sphi 0, %s87
      %s102 = sphi 0, %s88
      %s106 = sphi 0, %s106
      %s108 = sphi 0, %s106
      %s109 = sphi 0, %s108
      %s123 = sphi 0, %s109
      %s127 = sphi 0, %s127
      %s129 = sphi 0, %s127
      %s130 = sphi 0, %s129
      %s144 = sphi 0, %s130
      %s148 = sphi 0, %s148
      %s150 = sphi 0, %s148
      %s151 = sphi 0, %s150
      %s165 = sphi 0, %s151
      %s169 = sphi 0, %s169
      %s171 = sphi 0, %s169
      %s172 = sphi 0, %s171
      %s186 = sphi 0, %s172
      %s190 = sphi 0, %s190
      %s192 = sphi 0, %s190
      %s193 = sphi 0, %s192
      %s207 = sphi 0, %s193
      %s211 = sphi 0, %s211
      %s213 = sphi 0, %s211
      %s214 = sphi 0, %s213
      %s228 = sphi 0, %s214
      %s232 = sphi 0, %s232
      %s234 = sphi 0, %s232
      %s235 = sphi 0, %s234
      %s249 = sphi 0, %s235
      %s253 = sphi 0, %s253
      %s255 = sphi 0, %s253
      %s256 = sphi 0, %s255
      %s270 = sphi 0, %s256
      %s274 = sphi 0, %s274
      %s276 = sphi 0, %s274
      %s277 = sphi 0, %s276
      %s291 = sphi 0, %s277
      %s295 = sphi 0, %s295
      %s297 = sphi 0, %s295
      %s298 = sphi 0, %s297
      %s312 = sphi 0, %s298
      %s316 = sphi 0, %s316
      %s318 = sphi 0, %s316
      %s319 = sphi 0, %s318
      %s333 = sphi 0, %s319
      %s339 = sphi 0, %s341
      %s342 = sphi 0, %s339
      %s343 = sphi 0, %s342
      %s359 = sphi 0, %s343
      %s365 = sphi 0, %s367
      %s368 = sphi 0, %s365
      %s369 = sphi 0, %s368
      %s385 = sphi 0, %s369
    $region4: #{tpu_custom_call.1} parent=1 // loop_header_branch
      %33 = sbr.rel (%p31) target = $region8
    $region5: #{tpu_custom_call.1} parent=1 // loop_body
      %s35 = ssub.s32 %s30, 1
      %s36 = ssub.s32 %s30, 2
      %s37 = sadd.s32 %s30, 1
      %s38 = ssub.s32 %s30, %s37
      %p39 = scmp.eq.s32.totalorder %s38, 0
      %s41 = sadd.s32 %s40, 1
      %s42 = scalar_select %p39, %s40, %s41
      %p45 = pneg %p39
      %p46 = scmp.eq.s32.totalorder %s30, 1
      %p47 = por %p45, %p46
      %p48 = scmp.ne.s32.totalorder %s40, %s43
      %p49 = scmp.eq.s32.totalorder %s30, 0
      %p50 = por %p48, %p49
      %p51 = scmp.ne.s32.totalorder %s40, %s43
      %p52 = scmp.eq.s32.totalorder %s35, 1
      %p53 = por %p51, %p52
      %p54 = scmp.ne.s32.totalorder %s43, %s44
      %p55 = scmp.eq.s32.totalorder %s35, 0
      %p56 = por %p54, %p55
      %p57 = scmp.ne.s32.totalorder %s43, %s44
      %p58 = scmp.eq.s32.totalorder %s36, 1
      %p59 = por %p57, %p58
      %p61 = scmp.ne.s32.totalorder %s44, %s60
      %p62 = scmp.eq.s32.totalorder %s36, 0
      %p63 = por %p61, %p62
      %s65 = sadd.s32 %s64, 1
      %p68 = scmp.eq.s32.totalorder %s30, 1
      %p69 = scmp.ne.s32.totalorder %s64, %s66
      %p70 = scmp.eq.s32.totalorder %s30, 0
      %p71 = por %p69, %p70
      %p72 = scmp.ne.s32.totalorder %s64, %s66
      %p73 = scmp.eq.s32.totalorder %s35, 1
      %p74 = por %p72, %p73
      %p75 = scmp.ne.s32.totalorder %s66, %s67
      %p76 = scmp.eq.s32.totalorder %s35, 0
      %p77 = por %p75, %p76
      %p78 = scmp.ne.s32.totalorder %s66, %s67
      %p79 = scmp.eq.s32.totalorder %s36, 1
      %p80 = por %p78, %p79
      %p82 = scmp.ne.s32.totalorder %s67, %s81
      %p83 = scmp.eq.s32.totalorder %s36, 0
      %p84 = por %p82, %p83
      %s86 = sadd.s32 %s85, 1
      %p89 = scmp.eq.s32.totalorder %s30, 1
      %p90 = scmp.ne.s32.totalorder %s85, %s87
      %p91 = scmp.eq.s32.totalorder %s30, 0
      %p92 = por %p90, %p91
      %p93 = scmp.ne.s32.totalorder %s85, %s87
      %p94 = scmp.eq.s32.totalorder %s35, 1
      %p95 = por %p93, %p94
      %p96 = scmp.ne.s32.totalorder %s87, %s88
      %p97 = scmp.eq.s32.totalorder %s35, 0
      %p98 = por %p96, %p97
      %p99 = scmp.ne.s32.totalorder %s87, %s88
      %p100 = scmp.eq.s32.totalorder %s36, 1
      %p101 = por %p99, %p100
      %p103 = scmp.ne.s32.totalorder %s88, %s102
      %p104 = scmp.eq.s32.totalorder %s36, 0
      %p105 = por %p103, %p104
      %s107 = sadd.s32 %s106, 1
      %p110 = scmp.eq.s32.totalorder %s30, 1
      %p111 = scmp.ne.s32.totalorder %s106, %s108
      %p112 = scmp.eq.s32.totalorder %s30, 0
      %p113 = por %p111, %p112
      %p114 = scmp.ne.s32.totalorder %s106, %s108
      %p115 = scmp.eq.s32.totalorder %s35, 1
      %p116 = por %p114, %p115
      %p117 = scmp.ne.s32.totalorder %s108, %s109
      %p118 = scmp.eq.s32.totalorder %s35, 0
      %p119 = por %p117, %p118
      %p120 = scmp.ne.s32.totalorder %s108, %s109
      %p121 = scmp.eq.s32.totalorder %s36, 1
      %p122 = por %p120, %p121
      %p124 = scmp.ne.s32.totalorder %s109, %s123
      %p125 = scmp.eq.s32.totalorder %s36, 0
      %p126 = por %p124, %p125
      %s128 = sadd.s32 %s127, 1
      %p131 = scmp.eq.s32.totalorder %s30, 1
      %p132 = scmp.ne.s32.totalorder %s127, %s129
      %p133 = scmp.eq.s32.totalorder %s30, 0
      %p134 = por %p132, %p133
      %p135 = scmp.ne.s32.totalorder %s127, %s129
      %p136 = scmp.eq.s32.totalorder %s35, 1
      %p137 = por %p135, %p136
      %p138 = scmp.ne.s32.totalorder %s129, %s130
      %p139 = scmp.eq.s32.totalorder %s35, 0
      %p140 = por %p138, %p139
      %p141 = scmp.ne.s32.totalorder %s129, %s130
      %p142 = scmp.eq.s32.totalorder %s36, 1
      %p143 = por %p141, %p142
      %p145 = scmp.ne.s32.totalorder %s130, %s144
      %p146 = scmp.eq.s32.totalorder %s36, 0
      %p147 = por %p145, %p146
      %s149 = sadd.s32 %s148, 1
      %p152 = scmp.eq.s32.totalorder %s30, 1
      %p153 = scmp.ne.s32.totalorder %s148, %s150
      %p154 = scmp.eq.s32.totalorder %s30, 0
      %p155 = por %p153, %p154
      %p156 = scmp.ne.s32.totalorder %s148, %s150
      %p157 = scmp.eq.s32.totalorder %s35, 1
      %p158 = por %p156, %p157
      %p159 = scmp.ne.s32.totalorder %s150, %s151
      %p160 = scmp.eq.s32.totalorder %s35, 0
      %p161 = por %p159, %p160
      %p162 = scmp.ne.s32.totalorder %s150, %s151
      %p163 = scmp.eq.s32.totalorder %s36, 1
      %p164 = por %p162, %p163
      %p166 = scmp.ne.s32.totalorder %s151, %s165
      %p167 = scmp.eq.s32.totalorder %s36, 0
      %p168 = por %p166, %p167
      %s170 = sadd.s32 %s169, 1
      %p173 = scmp.eq.s32.totalorder %s30, 1
      %p174 = scmp.ne.s32.totalorder %s169, %s171
      %p175 = scmp.eq.s32.totalorder %s30, 0
      %p176 = por %p174, %p175
      %p177 = scmp.ne.s32.totalorder %s169, %s171
      %p178 = scmp.eq.s32.totalorder %s35, 1
      %p179 = por %p177, %p178
      %p180 = scmp.ne.s32.totalorder %s171, %s172
      %p181 = scmp.eq.s32.totalorder %s35, 0
      %p182 = por %p180, %p181
      %p183 = scmp.ne.s32.totalorder %s171, %s172
      %p184 = scmp.eq.s32.totalorder %s36, 1
      %p185 = por %p183, %p184
      %p187 = scmp.ne.s32.totalorder %s172, %s186
      %p188 = scmp.eq.s32.totalorder %s36, 0
      %p189 = por %p187, %p188
      %s191 = sadd.s32 %s190, 1
      %p194 = scmp.eq.s32.totalorder %s30, 1
      %p195 = scmp.ne.s32.totalorder %s190, %s192
      %p196 = scmp.eq.s32.totalorder %s30, 0
      %p197 = por %p195, %p196
      %p198 = scmp.ne.s32.totalorder %s190, %s192
      %p199 = scmp.eq.s32.totalorder %s35, 1
      %p200 = por %p198, %p199
      %p201 = scmp.ne.s32.totalorder %s192, %s193
      %p202 = scmp.eq.s32.totalorder %s35, 0
      %p203 = por %p201, %p202
      %p204 = scmp.ne.s32.totalorder %s192, %s193
      %p205 = scmp.eq.s32.totalorder %s36, 1
      %p206 = por %p204, %p205
      %p208 = scmp.ne.s32.totalorder %s193, %s207
      %p209 = scmp.eq.s32.totalorder %s36, 0
      %p210 = por %p208, %p209
      %s212 = sadd.s32 %s211, 1
      %p215 = scmp.eq.s32.totalorder %s30, 1
      %p216 = scmp.ne.s32.totalorder %s211, %s213
      %p217 = scmp.eq.s32.totalorder %s30, 0
      %p218 = por %p216, %p217
      %p219 = scmp.ne.s32.totalorder %s211, %s213
      %p220 = scmp.eq.s32.totalorder %s35, 1
      %p221 = por %p219, %p220
      %p222 = scmp.ne.s32.totalorder %s213, %s214
      %p223 = scmp.eq.s32.totalorder %s35, 0
      %p224 = por %p222, %p223
      %p225 = scmp.ne.s32.totalorder %s213, %s214
      %p226 = scmp.eq.s32.totalorder %s36, 1
      %p227 = por %p225, %p226
      %p229 = scmp.ne.s32.totalorder %s214, %s228
      %p230 = scmp.eq.s32.totalorder %s36, 0
      %p231 = por %p229, %p230
      %s233 = sadd.s32 %s232, 1
      %p236 = scmp.eq.s32.totalorder %s30, 1
      %p237 = scmp.ne.s32.totalorder %s232, %s234
      %p238 = scmp.eq.s32.totalorder %s30, 0
      %p239 = por %p237, %p238
      %p240 = scmp.ne.s32.totalorder %s232, %s234
      %p241 = scmp.eq.s32.totalorder %s35, 1
      %p242 = por %p240, %p241
      %p243 = scmp.ne.s32.totalorder %s234, %s235
      %p244 = scmp.eq.s32.totalorder %s35, 0
      %p245 = por %p243, %p244
      %p246 = scmp.ne.s32.totalorder %s234, %s235
      %p247 = scmp.eq.s32.totalorder %s36, 1
      %p248 = por %p246, %p247
      %p250 = scmp.ne.s32.totalorder %s235, %s249
      %p251 = scmp.eq.s32.totalorder %s36, 0
      %p252 = por %p250, %p251
      %s254 = sadd.s32 %s253, 1
      %p257 = scmp.eq.s32.totalorder %s30, 1
      %p258 = scmp.ne.s32.totalorder %s253, %s255
      %p259 = scmp.eq.s32.totalorder %s30, 0
      %p260 = por %p258, %p259
      %p261 = scmp.ne.s32.totalorder %s253, %s255
      %p262 = scmp.eq.s32.totalorder %s35, 1
      %p263 = por %p261, %p262
      %p264 = scmp.ne.s32.totalorder %s255, %s256
      %p265 = scmp.eq.s32.totalorder %s35, 0
      %p266 = por %p264, %p265
      %p267 = scmp.ne.s32.totalorder %s255, %s256
      %p268 = scmp.eq.s32.totalorder %s36, 1
      %p269 = por %p267, %p268
      %p271 = scmp.ne.s32.totalorder %s256, %s270
      %p272 = scmp.eq.s32.totalorder %s36, 0
      %p273 = por %p271, %p272
      %s275 = sadd.s32 %s274, 1
      %p278 = scmp.eq.s32.totalorder %s30, 1
      %p279 = scmp.ne.s32.totalorder %s274, %s276
      %p280 = scmp.eq.s32.totalorder %s30, 0
      %p281 = por %p279, %p280
      %p282 = scmp.ne.s32.totalorder %s274, %s276
      %p283 = scmp.eq.s32.totalorder %s35, 1
      %p284 = por %p282, %p283
      %p285 = scmp.ne.s32.totalorder %s276, %s277
      %p286 = scmp.eq.s32.totalorder %s35, 0
      %p287 = por %p285, %p286
      %p288 = scmp.ne.s32.totalorder %s276, %s277
      %p289 = scmp.eq.s32.totalorder %s36, 1
      %p290 = por %p288, %p289
      %p292 = scmp.ne.s32.totalorder %s277, %s291
      %p293 = scmp.eq.s32.totalorder %s36, 0
      %p294 = por %p292, %p293
      %s296 = sadd.s32 %s295, 1
      %p299 = scmp.eq.s32.totalorder %s30, 1
      %p300 = scmp.ne.s32.totalorder %s295, %s297
      %p301 = scmp.eq.s32.totalorder %s30, 0
      %p302 = por %p300, %p301
      %p303 = scmp.ne.s32.totalorder %s295, %s297
      %p304 = scmp.eq.s32.totalorder %s35, 1
      %p305 = por %p303, %p304
      %p306 = scmp.ne.s32.totalorder %s297, %s298
      %p307 = scmp.eq.s32.totalorder %s35, 0
      %p308 = por %p306, %p307
      %p309 = scmp.ne.s32.totalorder %s297, %s298
      %p310 = scmp.eq.s32.totalorder %s36, 1
      %p311 = por %p309, %p310
      %p313 = scmp.ne.s32.totalorder %s298, %s312
      %p314 = scmp.eq.s32.totalorder %s36, 0
      %p315 = por %p313, %p314
      %s317 = sadd.s32 %s316, 1
      %p320 = scmp.eq.s32.totalorder %s30, 1
      %p321 = scmp.ne.s32.totalorder %s316, %s318
      %p322 = scmp.eq.s32.totalorder %s30, 0
      %p323 = por %p321, %p322
      %p324 = scmp.ne.s32.totalorder %s316, %s318
      %p325 = scmp.eq.s32.totalorder %s35, 1
      %p326 = por %p324, %p325
      %p327 = scmp.ne.s32.totalorder %s318, %s319
      %p328 = scmp.eq.s32.totalorder %s35, 0
      %p329 = por %p327, %p328
      %p330 = scmp.ne.s32.totalorder %s318, %s319
      %p331 = scmp.eq.s32.totalorder %s36, 1
      %p332 = por %p330, %p331
      %p334 = scmp.ne.s32.totalorder %s319, %s333
      %p335 = scmp.eq.s32.totalorder %s36, 0
      %p336 = por %p334, %p335
      %s337 = ssub.s32 %s30, %s37
      %p338 = scmp.eq.s32.totalorder %s337, 0
      %s340 = sadd.s32 %s339, 1
      %s341 = scalar_select %p338, %s339, %s340
      %p344 = pneg %p338
      %p345 = scmp.eq.s32.totalorder %s30, 1
      %p346 = por %p344, %p345
      %p347 = scmp.ne.s32.totalorder %s339, %s342
      %p348 = scmp.eq.s32.totalorder %s30, 0
      %p349 = por %p347, %p348
      %p350 = scmp.ne.s32.totalorder %s339, %s342
      %p351 = scmp.eq.s32.totalorder %s35, 1
      %p352 = por %p350, %p351
      %p353 = scmp.ne.s32.totalorder %s342, %s343
      %p354 = scmp.eq.s32.totalorder %s35, 0
      %p355 = por %p353, %p354
      %p356 = scmp.ne.s32.totalorder %s342, %s343
      %p357 = scmp.eq.s32.totalorder %s36, 1
      %p358 = por %p356, %p357
      %p360 = scmp.ne.s32.totalorder %s343, %s359
      %p361 = scmp.eq.s32.totalorder %s36, 0
      %p362 = por %p360, %p361
      %s363 = ssub.s32 %s30, %s37
      %p364 = scmp.eq.s32.totalorder %s363, 0
      %s366 = sadd.s32 %s365, 1
      %s367 = scalar_select %p364, %s365, %s366
      %p370 = pneg %p364
      %p371 = scmp.eq.s32.totalorder %s30, 1
      %p372 = por %p370, %p371
      %p373 = scmp.ne.s32.totalorder %s365, %s368
      %p374 = scmp.eq.s32.totalorder %s30, 0
      %p375 = por %p373, %p374
      %p376 = scmp.ne.s32.totalorder %s365, %s368
      %p377 = scmp.eq.s32.totalorder %s35, 1
      %p378 = por %p376, %p377
      %p379 = scmp.ne.s32.totalorder %s368, %s369
      %p380 = scmp.eq.s32.totalorder %s35, 0
      %p381 = por %p379, %p380
      %p382 = scmp.ne.s32.totalorder %s368, %s369
      %p383 = scmp.eq.s32.totalorder %s36, 1
      %p384 = por %p382, %p383
      %p386 = scmp.ne.s32.totalorder %s369, %s385
      %p387 = scmp.eq.s32.totalorder %s36, 0
      %p388 = por %p386, %p387
      %p389 = scmp.le.s32.totalorder 1, %s30
      %p390 = scmp.lt.s32.totalorder %s30, 3
      %p391 = pnand %p389, %p390
      %p392 = pneg %p391
      // Predicated region
      $region9: #{tpu_custom_call.1} parent=5 // pred_check
        _
      $region10: #{tpu_custom_call.1} parent=5 // pred_check_branch
        %394 = sbr.rel (%p391) target = $region12
      $region11: #{tpu_custom_call.1} parent=5 // pred_region
        %s395 = ssub.s32 %s30, 1
        // Predicated region
        $region13: #{tpu_custom_call.1} parent=11 // pred_check
          %p396 = pneg %p77
        $region14: #{tpu_custom_call.1} parent=11 // pred_check_branch
          %398 = sbr.rel (%p396) target = $region16
        $region15: #{tpu_custom_call.1} parent=11 // pred_region
          %400 = vsyncadd [#allocation4], 0
          %s401 = sshll.u32 %s1, 4
          %s402 = int_to_ptr.hbm [resolvable:$true] %s401
          %s403 = sshll.u32 [#allocation3], 4
          %s404 = int_to_ptr.vmem [resolvable:$true] %s403
          %409 = dma.hbm_to_vmem [thread:$0]  %s402, 288, %s404, [#allocation4], 32, 32, 2
        $region16: #{tpu_custom_call.1} parent=11 // pred_fallthru
          _
        // Predicated region
        $region17: #{tpu_custom_call.1} parent=11 // pred_check
          %p410 = pneg %p98
        $region18: #{tpu_custom_call.1} parent=11 // pred_check_branch
          %412 = sbr.rel (%p410) target = $region20
        $region19: #{tpu_custom_call.1} parent=11 // pred_region
          %414 = vsyncadd [#allocation7], 0
          %s415 = sshll.u32 %s2, 4
          %s416 = int_to_ptr.hbm [resolvable:$true] %s415
          %s417 = sshll.u32 [#allocation6], 4
          %s418 = int_to_ptr.vmem [resolvable:$true] %s417
          %423 = dma.hbm_to_vmem [thread:$0]  %s416, 256, %s418, [#allocation7], 128, 128, 8
        $region20: #{tpu_custom_call.1} parent=11 // pred_fallthru
          _
        // Predicated region
        $region21: #{tpu_custom_call.1} parent=11 // pred_check
          %p424 = pneg %p119
        $region22: #{tpu_custom_call.1} parent=11 // pred_check_branch
          %426 = sbr.rel (%p424) target = $region24
        $region23: #{tpu_custom_call.1} parent=11 // pred_region
          _
        $region24: #{tpu_custom_call.1} parent=11 // pred_fallthru
          _
        // Predicated region
        $region25: #{tpu_custom_call.1} parent=11 // pred_check
          %p427 = pneg %p140
        $region26: #{tpu_custom_call.1} parent=11 // pred_check_branch
          %429 = sbr.rel (%p427) target = $region28
        $region27: #{tpu_custom_call.1} parent=11 // pred_region
          _
        $region28: #{tpu_custom_call.1} parent=11 // pred_fallthru
          _
        // Predicated region
        $region29: #{tpu_custom_call.1} parent=11 // pred_check
          %p430 = pneg %p161
        $region30: #{tpu_custom_call.1} parent=11 // pred_check_branch
          %432 = sbr.rel (%p430) target = $region32
        $region31: #{tpu_custom_call.1} parent=11 // pred_region
          _
        $region32: #{tpu_custom_call.1} parent=11 // pred_fallthru
          _
        // Predicated region
        $region33: #{tpu_custom_call.1} parent=11 // pred_check
          %p433 = pneg %p182
        $region34: #{tpu_custom_call.1} parent=11 // pred_check_branch
          %435 = sbr.rel (%p433) target = $region36
        $region35: #{tpu_custom_call.1} parent=11 // pred_region
          %437 = vsyncadd [#allocation7], 0
          %s438 = sshll.u32 %s6, 4
          %s439 = int_to_ptr.hbm [resolvable:$true] %s438
          %s440 = sshll.u32 [#allocation8], 4
          %s441 = int_to_ptr.vmem [resolvable:$true] %s440
          %446 = dma.hbm_to_vmem [thread:$0]  %s439, 512, %s441, [#allocation7], 256, 256, 16
        $region36: #{tpu_custom_call.1} parent=11 // pred_fallthru
          _
        // Predicated region
        $region37: #{tpu_custom_call.1} parent=11 // pred_check
          %p447 = pneg %p203
        $region38: #{tpu_custom_call.1} parent=11 // pred_check_branch
          %449 = sbr.rel (%p447) target = $region40
        $region39: #{tpu_custom_call.1} parent=11 // pred_region
          _
        $region40: #{tpu_custom_call.1} parent=11 // pred_fallthru
          _
        // Predicated region
        $region41: #{tpu_custom_call.1} parent=11 // pred_check
          %p450 = pneg %p224
        $region42: #{tpu_custom_call.1} parent=11 // pred_check_branch
          %452 = sbr.rel (%p450) target = $region44
        $region43: #{tpu_custom_call.1} parent=11 // pred_region
          _
        $region44: #{tpu_custom_call.1} parent=11 // pred_fallthru
          _
        // Predicated region
        $region45: #{tpu_custom_call.1} parent=11 // pred_check
          %p453 = pneg %p245
        $region46: #{tpu_custom_call.1} parent=11 // pred_check_branch
          %455 = sbr.rel (%p453) target = $region48
        $region47: #{tpu_custom_call.1} parent=11 // pred_region
          _
        $region48: #{tpu_custom_call.1} parent=11 // pred_fallthru
          _
        // Predicated region
        $region49: #{tpu_custom_call.1} parent=11 // pred_check
          %p456 = pneg %p266
        $region50: #{tpu_custom_call.1} parent=11 // pred_check_branch
          %458 = sbr.rel (%p456) target = $region52
        $region51: #{tpu_custom_call.1} parent=11 // pred_region
          %460 = vsyncadd [#allocation10], 0
          %s461 = sshll.u32 %s10, 4
          %s462 = int_to_ptr.hbm [resolvable:$true] %s461
          %s463 = sshll.u32 [#allocation9], 4
          %s464 = int_to_ptr.vmem [resolvable:$true] %s463
          %469 = dma.hbm_to_vmem [thread:$0]  %s462, 512, %s464, [#allocation10], 256, 256, 16
        $region52: #{tpu_custom_call.1} parent=11 // pred_fallthru
          _
        // Predicated region
        $region53: #{tpu_custom_call.1} parent=11 // pred_check
          %p470 = pneg %p287
        $region54: #{tpu_custom_call.1} parent=11 // pred_check_branch
          %472 = sbr.rel (%p470) target = $region56
        $region55: #{tpu_custom_call.1} parent=11 // pred_region
          _
        $region56: #{tpu_custom_call.1} parent=11 // pred_fallthru
          _
        // Predicated region
        $region57: #{tpu_custom_call.1} parent=11 // pred_check
          %p473 = pneg %p308
        $region58: #{tpu_custom_call.1} parent=11 // pred_check_branch
          %475 = sbr.rel (%p473) target = $region60
        $region59: #{tpu_custom_call.1} parent=11 // pred_region
          _
        $region60: #{tpu_custom_call.1} parent=11 // pred_fallthru
          _
        // Predicated region
        $region61: #{tpu_custom_call.1} parent=11 // pred_check
          %p476 = pneg %p329
        $region62: #{tpu_custom_call.1} parent=11 // pred_check_branch
          %478 = sbr.rel (%p476) target = $region64
        $region63: #{tpu_custom_call.1} parent=11 // pred_region
          _
        $region64: #{tpu_custom_call.1} parent=11 // pred_fallthru
          _
      $region12: #{tpu_custom_call.1} parent=5 // pred_fallthru
        _
      %p479 = scmp.lt.s32.totalorder %s30, 2
      // Predicated region
      $region65: #{tpu_custom_call.1} parent=5 // pred_check
        %p480 = pneg %p479
      $region66: #{tpu_custom_call.1} parent=5 // pred_check_branch
        %482 = sbr.rel (%p480) target = $region68
      $region67: #{tpu_custom_call.1} parent=5 // pred_region
        // Predicated region
        $region69: #{tpu_custom_call.1} parent=67 // pred_check
          %p483 = pneg %p50
        $region70: #{tpu_custom_call.1} parent=67 // pred_check_branch
          %485 = sbr.rel (%p483) target = $region72
        $region71: #{tpu_custom_call.1} parent=67 // pred_region
          %p486 = scmp.lt.s32.totalorder %s30, 1
          %s487 = scalar_select %p486, %s30, 1
          %s488 = smul.addr %s487, 2
          %s489 = smul.addr %s488, 8
          %s490 = scalar_lea.vmem %s0, %s489
        $region72: #{tpu_custom_call.1} parent=67 // pred_fallthru
          _
      $region68: #{tpu_custom_call.1} parent=5 // pred_fallthru
        _
      %p491 = scmp.le.s32.totalorder 1, %s30
      %p492 = scmp.lt.s32.totalorder %s30, 3
      %p493 = pnand %p491, %p492
      %p494 = pneg %p493
      // Predicated region
      $region73: #{tpu_custom_call.1} parent=5 // pred_check
        _
      $region74: #{tpu_custom_call.1} parent=5 // pred_check_branch
        %496 = sbr.rel (%p493) target = $region76
      $region75: #{tpu_custom_call.1} parent=5 // pred_region
        %s497 = ssub.s32 %s30, 1
        // Predicated region
        $region77: #{tpu_custom_call.1} parent=75 // pred_check
          %p498 = pneg %p77
        $region78: #{tpu_custom_call.1} parent=75 // pred_check_branch
          %500 = sbr.rel (%p498) target = $region80
        $region79: #{tpu_custom_call.1} parent=75 // pred_region
          %502 = dma.done [#allocation4], 288
        $region80: #{tpu_custom_call.1} parent=75 // pred_fallthru
          _
        // Predicated region
        $region81: #{tpu_custom_call.1} parent=75 // pred_check
          %p503 = pneg %p98
        $region82: #{tpu_custom_call.1} parent=75 // pred_check_branch
          %505 = sbr.rel (%p503) target = $region84
        $region83: #{tpu_custom_call.1} parent=75 // pred_region
          %507 = dma.done [#allocation7], 256
        $region84: #{tpu_custom_call.1} parent=75 // pred_fallthru
          _
        // Predicated region
        $region85: #{tpu_custom_call.1} parent=75 // pred_check
          %p508 = pneg %p182
        $region86: #{tpu_custom_call.1} parent=75 // pred_check_branch
          %510 = sbr.rel (%p508) target = $region88
        $region87: #{tpu_custom_call.1} parent=75 // pred_region
          %512 = dma.done [#allocation7], 512
        $region88: #{tpu_custom_call.1} parent=75 // pred_fallthru
          _
        // Predicated region
        $region89: #{tpu_custom_call.1} parent=75 // pred_check
          %p513 = pneg %p266
        $region90: #{tpu_custom_call.1} parent=75 // pred_check_branch
          %515 = sbr.rel (%p513) target = $region92
        $region91: #{tpu_custom_call.1} parent=75 // pred_region
          %517 = dma.done [#allocation10], 512
        $region92: #{tpu_custom_call.1} parent=75 // pred_fallthru
          _
        %p518 = scmp.lt.s32.totalorder %s35, 1
        %s519 = scalar_select %p518, %s35, 1
        %s520 = smul.addr %s519, 2
        %s521 = smul.addr %s520, 8
        %s522 = scalar_lea.vmem %s0, %s521
        %p523 = pneg %p56
        %p524 = pneg %p53
        %p525 = pneg %p77
        %p526 = pneg %p74
        %p527 = pneg %p98
        %p528 = pneg %p95
        %p529 = pneg %p119
        %p530 = pneg %p116
        %p531 = pneg %p140
        %p532 = pneg %p137
        %p533 = pneg %p161
        %p534 = pneg %p158
        %p535 = pneg %p182
        %p536 = pneg %p179
        %p537 = pneg %p203
        %p538 = pneg %p200
        %p539 = pneg %p224
        %p540 = pneg %p221
        %p541 = pneg %p245
        %p542 = pneg %p242
        %p543 = pneg %p266
        %p544 = pneg %p263
        %p545 = pneg %p287
        %p546 = pneg %p284
        %p547 = pneg %p308
        %p548 = pneg %p305
        %p549 = pneg %p329
        %p550 = pneg %p326
        %p551 = pneg %p355
        %p552 = pneg %p352
        %s553 = sand.u32 %s342, 1
        %s554 = scalar_lea.sflag [#allocation5], %s553
        %s555 = sand.u32 %s342, 1
        %s556 = smul.addr %s555, 2
        %s557 = scalar_lea.vmem [#allocation11], %s556
        %p558 = pneg %p381
        %p559 = pneg %p378
        %p560 = scmp.lt.s32.totalorder %s35, 1
        %s561 = scalar_select %p560, %s35, 1
        %s562 = smul.addr %s561, 2
        %s563 = smul.addr %s562, 4
        %s564 = scalar_lea.vmem %s15, %s563
        %p565 = scmp.lt.s32.totalorder %s35, 1
        %s566 = scalar_select %p565, %s35, 1
        %s567 = smul.addr %s566, 2
        %s568 = smul.addr %s567, 8
        %s569 = scalar_lea.vmem %s0, %s568
        %p570 = scmp.lt.s32.totalorder %s35, 1
        %s571 = scalar_select %p570, %s35, 1
        %s572 = smul.addr %s571, 2
        %s573 = smul.addr %s572, 4
        %s574 = scalar_lea.vmem %s15, %s573
        %v575 = vld [vmem:[%s569] sm:$0xff]
        %v576 = vld [vmem:[%s569 + $0x8] sm:$0xff]
        %577 = vrot.lane.b32.xlu0 %v575, 17
        %v578 = vpop.permute.xlu0 %577
        %579 = vrot.lane.b32.xlu0 %v576, 17
        %v580 = vpop.permute.xlu0 %579
        %v581 = vlaneseq
        %v582 = vand.u32 %v581, 127
        %vm583 = vcmp.lt.s32.totalorder %v582, 17
        %v584 = vsel %vm583, %v578, %v580
        %v585 = vsel %vm583, %v580, %v578
        %v586 = vld [vmem:[#allocation3] sm:$0x3]
        %v588 = vperm.slane %v586, 0
        %v589 = vperm.slane %v586, 1
        %v592 = vmul.f32 %v585, %v588
        %v593 = vmul.f32 %v584, %v589
        %594 = vrot.lane.b32.xlu0 %v575, 16
        %v595 = vpop.permute.xlu0 %594
        %596 = vrot.lane.b32.xlu0 %v576, 16
        %v597 = vpop.permute.xlu0 %596
        %vm598 = vcmp.lt.s32.totalorder %v582, 16
        %v599 = vsel %vm598, %v595, %v597
        %v600 = vsel %vm598, %v597, %v595
        %s601 = scalar_lea.vmem [#allocation3], 2
        %v602 = vld [vmem:[%s601] sm:$0x3]
        %v604 = vperm.slane %v602, 0
        %v605 = vperm.slane %v602, 1
        %v608 = vmul.f32 %v600, %v604
        %v609 = vmul.f32 %v599, %v605
        %610 = vrot.lane.b32.xlu0 %v575, 15
        %v611 = vpop.permute.xlu0 %610
        %612 = vrot.lane.b32.xlu0 %v576, 15
        %v613 = vpop.permute.xlu0 %612
        %vm614 = vcmp.lt.s32.totalorder %v582, 15
        %v615 = vsel %vm614, %v611, %v613
        %v616 = vsel %vm614, %v613, %v611
        %s617 = scalar_lea.vmem [#allocation3], 4
        %v618 = vld [vmem:[%s617] sm:$0x3]
        %v620 = vperm.slane %v618, 0
        %v621 = vperm.slane %v618, 1
        %v624 = vmul.f32 %v616, %v620
        %v625 = vmul.f32 %v615, %v621
        %626 = vrot.lane.b32.xlu0 %v575, 1
        %v627 = vpop.permute.xlu0 %626
        %628 = vrot.lane.b32.xlu0 %v576, 1
        %v629 = vpop.permute.xlu0 %628
        %vm630 = vcmp.lt.s32.totalorder %v582, 1
        %v631 = vsel %vm630, %v627, %v629
        %v632 = vsel %vm630, %v629, %v627
        %s633 = scalar_lea.vmem [#allocation3], 6
        %v634 = vld [vmem:[%s633] sm:$0x3]
        %v636 = vperm.slane %v634, 0
        %v637 = vperm.slane %v634, 1
        %v640 = vmul.f32 %v632, %v636
        %v641 = vmul.f32 %v631, %v637
        %642 = vrot.lane.b32.xlu0 %v575, 127
        %v643 = vpop.permute.xlu0 %642
        %644 = vrot.lane.b32.xlu0 %v576, 127
        %v645 = vpop.permute.xlu0 %644
        %vm646 = vcmp.lt.s32.totalorder %v582, 127
        %v647 = vsel %vm646, %v643, %v645
        %v648 = vsel %vm646, %v645, %v643
        %s649 = scalar_lea.vmem [#allocation3], 10
        %v650 = vld [vmem:[%s649] sm:$0x3]
        %v652 = vperm.slane %v650, 0
        %v653 = vperm.slane %v650, 1
        %v656 = vmul.f32 %v647, %v652
        %v657 = vmul.f32 %v648, %v653
        %658 = vrot.lane.b32.xlu0 %v575, 113
        %v659 = vpop.permute.xlu0 %658
        %660 = vrot.lane.b32.xlu0 %v576, 113
        %v661 = vpop.permute.xlu0 %660
        %vm662 = vcmp.lt.s32.totalorder %v582, 113
        %v663 = vsel %vm662, %v659, %v661
        %v664 = vsel %vm662, %v661, %v659
        %s665 = scalar_lea.vmem [#allocation3], 12
        %v666 = vld [vmem:[%s665] sm:$0x3]
        %v668 = vperm.slane %v666, 0
        %v669 = vperm.slane %v666, 1
        %v672 = vmul.f32 %v663, %v668
        %v673 = vmul.f32 %v664, %v669
        %674 = vrot.lane.b32.xlu0 %v575, 112
        %v675 = vpop.permute.xlu0 %674
        %676 = vrot.lane.b32.xlu0 %v576, 112
        %v677 = vpop.permute.xlu0 %676
        %vm678 = vcmp.lt.s32.totalorder %v582, 112
        %v679 = vsel %vm678, %v675, %v677
        %v680 = vsel %vm678, %v677, %v675
        %s681 = scalar_lea.vmem [#allocation3], 14
        %v682 = vld [vmem:[%s681] sm:$0x3]
        %v684 = vperm.slane %v682, 0
        %v685 = vperm.slane %v682, 1
        %v688 = vmul.f32 %v679, %v684
        %v689 = vmul.f32 %v680, %v685
        %690 = vrot.lane.b32.xlu0 %v575, 111
        %v691 = vpop.permute.xlu0 %690
        %692 = vrot.lane.b32.xlu0 %v576, 111
        %v693 = vpop.permute.xlu0 %692
        %vm694 = vcmp.lt.s32.totalorder %v582, 111
        %v695 = vsel %vm694, %v691, %v693
        %v696 = vsel %vm694, %v693, %v691
        %s697 = scalar_lea.vmem [#allocation3], 16
        %v698 = vld [vmem:[%s697] sm:$0x3]
        %v700 = vperm.slane %v698, 0
        %v701 = vperm.slane %v698, 1
        %v704 = vmul.f32 %v695, %v700
        %v705 = vmul.f32 %v696, %v701
        %v706 = vld [vmem:[#allocation6] sm:$0xff]
        %v707 = vld [vmem:[#allocation6 + $0x8] sm:$0xff]
        %v708 = vld [vmem:[%s3] sm:$0xff]
        %v709 = vld [vmem:[%s3 + $0x8] sm:$0xff]
        %711 = vset.pattern.permute.xlu0 0
        %712 = vperm.xlu0 %711, %v708
        %v713 = vpop.permute.xlu0 %712
        %716 = vset.pattern.permute.xlu0 0
        %717 = vperm.xlu0 %716, %v709
        %v718 = vpop.permute.xlu0 %717
        %vm720 = vcmask 588800
        %v722 = vsel %vm720, %v706, 0
        %v725 = vsel %vm720, %v707, 0
        %727 = vmatpush.msra.mxu0 0.0
        %728 = vmatpush.msra.mxu0 0.0
        %729 = vmatpush.msra.mxu0 0.0
        %730 = vmatpush.msra.mxu0 0.0
        %731 = vmatpush.msra.mxu0 0.0
        %732 = vmatpush.msra.mxu0 0.0
        %733 = vmatpush.msra.mxu0 0.0
        %734 = vmatpush.msra.mxu0 %v704
        %735 = vmatpush.msra.mxu0 %v688
        %736 = vmatpush.msra.mxu0 %v672
        %737 = vmatpush.msra.mxu0 %v656
        %738 = vmatpush.msra.mxu0 %v575
        %739 = vmatpush.msra.mxu0 %v640
        %740 = vmatpush.msra.mxu0 %v624
        %741 = vmatpush.msra.mxu0 %v608
        %742 = vmatpush.msra.mxu0 %v592
        %743 = vmatmul.f32.gmra.mxu0 %v722
        %v744 = vpop.f32.mrf.mxu0
        %v745 = vadd.f32 %v713, %v744
        %746 = vmatmul.f32.gmra.mxu0 %v725
        %v747 = vpop.f32.mrf.mxu0
        %v748 = vadd.f32 %v718, %v747
        %749 = vdwg.mxu0
        %750 = vmatpush.msra.mxu0 0.0
        %751 = vmatpush.msra.mxu0 0.0
        %752 = vmatpush.msra.mxu0 0.0
        %753 = vmatpush.msra.mxu0 0.0
        %754 = vmatpush.msra.mxu0 0.0
        %755 = vmatpush.msra.mxu0 0.0
        %756 = vmatpush.msra.mxu0 0.0
        %757 = vmatpush.msra.mxu0 %v705
        %758 = vmatpush.msra.mxu0 %v689
        %759 = vmatpush.msra.mxu0 %v673
        %760 = vmatpush.msra.mxu0 %v657
        %761 = vmatpush.msra.mxu0 %v576
        %762 = vmatpush.msra.mxu0 %v641
        %763 = vmatpush.msra.mxu0 %v625
        %764 = vmatpush.msra.mxu0 %v609
        %765 = vmatpush.msra.mxu0 %v593
        %766 = vmatmul.f32.gmra.mxu0 %v722
        %v767 = vpop.f32.mrf.mxu0
        %v768 = vadd.f32 %v713, %v767
        %769 = vmatmul.f32.gmra.mxu0 %v725
        %v770 = vpop.f32.mrf.mxu0
        %v771 = vadd.f32 %v718, %v770
        %772 = vdwg.mxu0
        %v773 = vmax.f32 %v745, 0.0
        %v774 = vmax.f32 %v768, 0.0
        %v775 = vmax.f32 %v748, 0.0
        %v776 = vmax.f32 %v771, 0.0
        %777 = vrot.lane.b32.xlu0 %v773, 17
        %v778 = vpop.permute.xlu0 %777
        %779 = vrot.lane.b32.xlu0 %v775, 17
        %v780 = vpop.permute.xlu0 %779
        %781 = vrot.lane.b32.xlu0 %v774, 17
        %v782 = vpop.permute.xlu0 %781
        %783 = vrot.lane.b32.xlu0 %v776, 17
        %v784 = vpop.permute.xlu0 %783
        %v785 = vsel %vm583, %v778, %v782
        %v786 = vsel %vm583, %v780, %v784
        %v787 = vsel %vm583, %v782, %v778
        %v788 = vsel %vm583, %v784, %v780
        %v789 = vmul.f32 %v787, %v588
        %v790 = vmul.f32 %v785, %v589
        %v791 = vmul.f32 %v788, %v588
        %v792 = vmul.f32 %v786, %v589
        %793 = vrot.lane.b32.xlu0 %v773, 16
        %v794 = vpop.permute.xlu0 %793
        %795 = vrot.lane.b32.xlu0 %v775, 16
        %v796 = vpop.permute.xlu0 %795
        %797 = vrot.lane.b32.xlu0 %v774, 16
        %v798 = vpop.permute.xlu0 %797
        %799 = vrot.lane.b32.xlu0 %v776, 16
        %v800 = vpop.permute.xlu0 %799
        %v801 = vsel %vm598, %v794, %v798
        %v802 = vsel %vm598, %v796, %v800
        %v803 = vsel %vm598, %v798, %v794
        %v804 = vsel %vm598, %v800, %v796
        %v805 = vmul.f32 %v803, %v604
        %v806 = vmul.f32 %v801, %v605
        %v807 = vmul.f32 %v804, %v604
        %v808 = vmul.f32 %v802, %v605
        %809 = vrot.lane.b32.xlu0 %v773, 15
        %v810 = vpop.permute.xlu0 %809
        %811 = vrot.lane.b32.xlu0 %v775, 15
        %v812 = vpop.permute.xlu0 %811
        %813 = vrot.lane.b32.xlu0 %v774, 15
        %v814 = vpop.permute.xlu0 %813
        %815 = vrot.lane.b32.xlu0 %v776, 15
        %v816 = vpop.permute.xlu0 %815
        %v817 = vsel %vm614, %v810, %v814
        %v818 = vsel %vm614, %v812, %v816
        %v819 = vsel %vm614, %v814, %v810
        %v820 = vsel %vm614, %v816, %v812
        %v821 = vmul.f32 %v819, %v620
        %v822 = vmul.f32 %v817, %v621
        %v823 = vmul.f32 %v820, %v620
        %v824 = vmul.f32 %v818, %v621
        %825 = vrot.lane.b32.xlu0 %v773, 1
        %v826 = vpop.permute.xlu0 %825
        %827 = vrot.lane.b32.xlu0 %v775, 1
        %v828 = vpop.permute.xlu0 %827
        %829 = vrot.lane.b32.xlu0 %v774, 1
        %v830 = vpop.permute.xlu0 %829
        %831 = vrot.lane.b32.xlu0 %v776, 1
        %v832 = vpop.permute.xlu0 %831
        %v833 = vsel %vm630, %v826, %v830
        %v834 = vsel %vm630, %v828, %v832
        %v835 = vsel %vm630, %v830, %v826
        %v836 = vsel %vm630, %v832, %v828
        %v837 = vmul.f32 %v835, %v636
        %v838 = vmul.f32 %v833, %v637
        %v839 = vmul.f32 %v836, %v636
        %v840 = vmul.f32 %v834, %v637
        %841 = vrot.lane.b32.xlu0 %v773, 127
        %v842 = vpop.permute.xlu0 %841
        %843 = vrot.lane.b32.xlu0 %v775, 127
        %v844 = vpop.permute.xlu0 %843
        %845 = vrot.lane.b32.xlu0 %v774, 127
        %v846 = vpop.permute.xlu0 %845
        %847 = vrot.lane.b32.xlu0 %v776, 127
        %v848 = vpop.permute.xlu0 %847
        %v849 = vsel %vm646, %v842, %v846
        %v850 = vsel %vm646, %v844, %v848
        %v851 = vsel %vm646, %v846, %v842
        %v852 = vsel %vm646, %v848, %v844
        %v853 = vmul.f32 %v849, %v652
        %v854 = vmul.f32 %v851, %v653
        %v855 = vmul.f32 %v850, %v652
        %v856 = vmul.f32 %v852, %v653
        %857 = vrot.lane.b32.xlu0 %v773, 113
        %v858 = vpop.permute.xlu0 %857
        %859 = vrot.lane.b32.xlu0 %v775, 113
        %v860 = vpop.permute.xlu0 %859
        %861 = vrot.lane.b32.xlu0 %v774, 113
        %v862 = vpop.permute.xlu0 %861
        %863 = vrot.lane.b32.xlu0 %v776, 113
        %v864 = vpop.permute.xlu0 %863
        %v865 = vsel %vm662, %v858, %v862
        %v866 = vsel %vm662, %v860, %v864
        %v867 = vsel %vm662, %v862, %v858
        %v868 = vsel %vm662, %v864, %v860
        %v869 = vmul.f32 %v865, %v668
        %v870 = vmul.f32 %v867, %v669
        %v871 = vmul.f32 %v866, %v668
        %v872 = vmul.f32 %v868, %v669
        %873 = vrot.lane.b32.xlu0 %v773, 112
        %v874 = vpop.permute.xlu0 %873
        %875 = vrot.lane.b32.xlu0 %v775, 112
        %v876 = vpop.permute.xlu0 %875
        %877 = vrot.lane.b32.xlu0 %v774, 112
        %v878 = vpop.permute.xlu0 %877
        %879 = vrot.lane.b32.xlu0 %v776, 112
        %v880 = vpop.permute.xlu0 %879
        %v881 = vsel %vm678, %v874, %v878
        %v882 = vsel %vm678, %v876, %v880
        %v883 = vsel %vm678, %v878, %v874
        %v884 = vsel %vm678, %v880, %v876
        %v885 = vmul.f32 %v881, %v684
        %v886 = vmul.f32 %v883, %v685
        %v887 = vmul.f32 %v882, %v684
        %v888 = vmul.f32 %v884, %v685
        %889 = vrot.lane.b32.xlu0 %v773, 111
        %v890 = vpop.permute.xlu0 %889
        %891 = vrot.lane.b32.xlu0 %v775, 111
        %v892 = vpop.permute.xlu0 %891
        %893 = vrot.lane.b32.xlu0 %v774, 111
        %v894 = vpop.permute.xlu0 %893
        %895 = vrot.lane.b32.xlu0 %v776, 111
        %v896 = vpop.permute.xlu0 %895
        %v897 = vsel %vm694, %v890, %v894
        %v898 = vsel %vm694, %v892, %v896
        %v899 = vsel %vm694, %v894, %v890
        %v900 = vsel %vm694, %v896, %v892
        %v901 = vmul.f32 %v897, %v700
        %v902 = vmul.f32 %v899, %v701
        %v903 = vmul.f32 %v898, %v700
        %v904 = vmul.f32 %v900, %v701
        %v905 = vld [vmem:[%s4] sm:$0xff]
        %v906 = vld [vmem:[%s4 + $0x8] sm:$0xff]
        %v907 = vld [vmem:[%s4 + $0x10] sm:$0xff]
        %v908 = vld [vmem:[%s4 + $0x18] sm:$0xff]
        %v909 = vld [vmem:[%s5] sm:$0xff]
        %v910 = vld [vmem:[%s5 + $0x8] sm:$0xff]
        %912 = vset.pattern.permute.xlu0 0
        %913 = vperm.xlu0 %912, %v909
        %v914 = vpop.permute.xlu0 %913
        %917 = vset.pattern.permute.xlu0 0
        %918 = vperm.xlu0 %917, %v910
        %v919 = vpop.permute.xlu0 %918
        %vm921 = vcmask 130048
        %v923 = vsel %vm921, %v906, 0
        %v926 = vsel %vm921, %v908, 0
        %928 = vmatpush.msra.mxu0 %v887
        %929 = vmatpush.msra.mxu0 %v885
        %930 = vmatpush.msra.mxu0 %v871
        %931 = vmatpush.msra.mxu0 %v869
        %932 = vmatpush.msra.mxu0 %v855
        %933 = vmatpush.msra.mxu0 %v853
        %934 = vmatpush.msra.mxu0 %v775
        %935 = vmatpush.msra.mxu0 %v773
        %936 = vmatpush.msra.mxu0 %v839
        %937 = vmatpush.msra.mxu0 %v837
        %938 = vmatpush.msra.mxu0 %v823
        %939 = vmatpush.msra.mxu0 %v821
        %940 = vmatpush.msra.mxu0 %v807
        %941 = vmatpush.msra.mxu0 %v805
        %942 = vmatpush.msra.mxu0 %v791
        %943 = vmatpush.msra.mxu0 %v789
        %944 = vmatmul.f32.gmra.mxu0 %v905
        %v945 = vpop.f32.mrf.mxu0
        %v946 = vadd.f32 %v914, %v945
        %947 = vmatmul.f32.gmra.mxu0 %v907
        %v948 = vpop.f32.mrf.mxu0
        %v949 = vadd.f32 %v919, %v948
        %950 = vdwg.mxu0
        %951 = vmatpush.msra.mxu0 0.0
        %952 = vmatpush.msra.mxu0 0.0
        %953 = vmatpush.msra.mxu0 0.0
        %954 = vmatpush.msra.mxu0 0.0
        %955 = vmatpush.msra.mxu0 0.0
        %956 = vmatpush.msra.mxu0 0.0
        %957 = vmatpush.msra.mxu0 0.0
        %958 = vmatpush.msra.mxu0 0.0
        %959 = vmatpush.msra.mxu0 0.0
        %960 = vmatpush.msra.mxu0 0.0
        %961 = vmatpush.msra.mxu0 0.0
        %962 = vmatpush.msra.mxu0 0.0
        %963 = vmatpush.msra.mxu0 0.0
        %964 = vmatpush.msra.mxu0 0.0
        %965 = vmatpush.msra.mxu0 %v903
        %966 = vmatpush.msra.mxu0 %v901
        %967 = vmatmul.f32.gmra.mxu0 %v923
        %v968 = vpop.f32.mrf.mxu0
        %v969 = vadd.f32 %v946, %v968
        %970 = vmatmul.f32.gmra.mxu0 %v926
        %v971 = vpop.f32.mrf.mxu0
        %v972 = vadd.f32 %v949, %v971
        %973 = vdwg.mxu0
        %974 = vmatpush.msra.mxu0 %v888
        %975 = vmatpush.msra.mxu0 %v886
        %976 = vmatpush.msra.mxu0 %v872
        %977 = vmatpush.msra.mxu0 %v870
        %978 = vmatpush.msra.mxu0 %v856
        %979 = vmatpush.msra.mxu0 %v854
        %980 = vmatpush.msra.mxu0 %v776
        %981 = vmatpush.msra.mxu0 %v774
        %982 = vmatpush.msra.mxu0 %v840
        %983 = vmatpush.msra.mxu0 %v838
        %984 = vmatpush.msra.mxu0 %v824
        %985 = vmatpush.msra.mxu0 %v822
        %986 = vmatpush.msra.mxu0 %v808
        %987 = vmatpush.msra.mxu0 %v806
        %988 = vmatpush.msra.mxu0 %v792
        %989 = vmatpush.msra.mxu0 %v790
        %990 = vmatmul.f32.gmra.mxu0 %v905
        %v991 = vpop.f32.mrf.mxu0
        %v992 = vadd.f32 %v914, %v991
        %993 = vmatmul.f32.gmra.mxu0 %v907
        %v994 = vpop.f32.mrf.mxu0
        %v995 = vadd.f32 %v919, %v994
        %996 = vdwg.mxu0
        %997 = vmatpush.msra.mxu0 0.0
        %998 = vmatpush.msra.mxu0 0.0
        %999 = vmatpush.msra.mxu0 0.0
        %1000 = vmatpush.msra.mxu0 0.0
        %1001 = vmatpush.msra.mxu0 0.0
        %1002 = vmatpush.msra.mxu0 0.0
        %1003 = vmatpush.msra.mxu0 0.0
        %1004 = vmatpush.msra.mxu0 0.0
        %1005 = vmatpush.msra.mxu0 0.0
        %1006 = vmatpush.msra.mxu0 0.0
        %1007 = vmatpush.msra.mxu0 0.0
        %1008 = vmatpush.msra.mxu0 0.0
        %1009 = vmatpush.msra.mxu0 0.0
        %1010 = vmatpush.msra.mxu0 0.0
        %1011 = vmatpush.msra.mxu0 %v904
        %1012 = vmatpush.msra.mxu0 %v902
        %1013 = vmatmul.f32.gmra.mxu0 %v923
        %v1014 = vpop.f32.mrf.mxu0
        %v1015 = vadd.f32 %v992, %v1014
        %1016 = vmatmul.f32.gmra.mxu0 %v926
        %v1017 = vpop.f32.mrf.mxu0
        %v1018 = vadd.f32 %v995, %v1017
        %1019 = vdwg.mxu0
        %v1020 = vmax.f32 %v969, 0.0
        %v1021 = vmax.f32 %v1015, 0.0
        %v1022 = vmax.f32 %v972, 0.0
        %v1023 = vmax.f32 %v1018, 0.0
        %1024 = vrot.lane.b32.xlu0 %v1020, 17
        %v1025 = vpop.permute.xlu0 %1024
        %1026 = vrot.lane.b32.xlu0 %v1022, 17
        %v1027 = vpop.permute.xlu0 %1026
        %1028 = vrot.lane.b32.xlu0 %v1021, 17
        %v1029 = vpop.permute.xlu0 %1028
        %1030 = vrot.lane.b32.xlu0 %v1023, 17
        %v1031 = vpop.permute.xlu0 %1030
        %v1032 = vsel %vm583, %v1025, %v1029
        %v1033 = vsel %vm583, %v1027, %v1031
        %v1034 = vsel %vm583, %v1029, %v1025
        %v1035 = vsel %vm583, %v1031, %v1027
        %v1036 = vmul.f32 %v1034, %v588
        %v1037 = vmul.f32 %v1032, %v589
        %v1038 = vmul.f32 %v1035, %v588
        %v1039 = vmul.f32 %v1033, %v589
        %1040 = vrot.lane.b32.xlu0 %v1020, 16
        %v1041 = vpop.permute.xlu0 %1040
        %1042 = vrot.lane.b32.xlu0 %v1022, 16
        %v1043 = vpop.permute.xlu0 %1042
        %1044 = vrot.lane.b32.xlu0 %v1021, 16
        %v1045 = vpop.permute.xlu0 %1044
        %1046 = vrot.lane.b32.xlu0 %v1023, 16
        %v1047 = vpop.permute.xlu0 %1046
        %v1048 = vsel %vm598, %v1041, %v1045
        %v1049 = vsel %vm598, %v1043, %v1047
        %v1050 = vsel %vm598, %v1045, %v1041
        %v1051 = vsel %vm598, %v1047, %v1043
        %v1052 = vmul.f32 %v1050, %v604
        %v1053 = vmul.f32 %v1048, %v605
        %v1054 = vmul.f32 %v1051, %v604
        %v1055 = vmul.f32 %v1049, %v605
        %1056 = vrot.lane.b32.xlu0 %v1020, 15
        %v1057 = vpop.permute.xlu0 %1056
        %1058 = vrot.lane.b32.xlu0 %v1022, 15
        %v1059 = vpop.permute.xlu0 %1058
        %1060 = vrot.lane.b32.xlu0 %v1021, 15
        %v1061 = vpop.permute.xlu0 %1060
        %1062 = vrot.lane.b32.xlu0 %v1023, 15
        %v1063 = vpop.permute.xlu0 %1062
        %v1064 = vsel %vm614, %v1057, %v1061
        %v1065 = vsel %vm614, %v1059, %v1063
        %v1066 = vsel %vm614, %v1061, %v1057
        %v1067 = vsel %vm614, %v1063, %v1059
        %v1068 = vmul.f32 %v1066, %v620
        %v1069 = vmul.f32 %v1064, %v621
        %v1070 = vmul.f32 %v1067, %v620
        %v1071 = vmul.f32 %v1065, %v621
        %1072 = vrot.lane.b32.xlu0 %v1020, 1
        %v1073 = vpop.permute.xlu0 %1072
        %1074 = vrot.lane.b32.xlu0 %v1022, 1
        %v1075 = vpop.permute.xlu0 %1074
        %1076 = vrot.lane.b32.xlu0 %v1021, 1
        %v1077 = vpop.permute.xlu0 %1076
        %1078 = vrot.lane.b32.xlu0 %v1023, 1
        %v1079 = vpop.permute.xlu0 %1078
        %v1080 = vsel %vm630, %v1073, %v1077
        %v1081 = vsel %vm630, %v1075, %v1079
        %v1082 = vsel %vm630, %v1077, %v1073
        %v1083 = vsel %vm630, %v1079, %v1075
        %v1084 = vmul.f32 %v1082, %v636
        %v1085 = vmul.f32 %v1080, %v637
        %v1086 = vmul.f32 %v1083, %v636
        %v1087 = vmul.f32 %v1081, %v637
        %1088 = vrot.lane.b32.xlu0 %v1020, 127
        %v1089 = vpop.permute.xlu0 %1088
        %1090 = vrot.lane.b32.xlu0 %v1022, 127
        %v1091 = vpop.permute.xlu0 %1090
        %1092 = vrot.lane.b32.xlu0 %v1021, 127
        %v1093 = vpop.permute.xlu0 %1092
        %1094 = vrot.lane.b32.xlu0 %v1023, 127
        %v1095 = vpop.permute.xlu0 %1094
        %v1096 = vsel %vm646, %v1089, %v1093
        %v1097 = vsel %vm646, %v1091, %v1095
        %v1098 = vsel %vm646, %v1093, %v1089
        %v1099 = vsel %vm646, %v1095, %v1091
        %v1100 = vmul.f32 %v1096, %v652
        %v1101 = vmul.f32 %v1098, %v653
        %v1102 = vmul.f32 %v1097, %v652
        %v1103 = vmul.f32 %v1099, %v653
        %1104 = vrot.lane.b32.xlu0 %v1020, 113
        %v1105 = vpop.permute.xlu0 %1104
        %1106 = vrot.lane.b32.xlu0 %v1022, 113
        %v1107 = vpop.permute.xlu0 %1106
        %1108 = vrot.lane.b32.xlu0 %v1021, 113
        %v1109 = vpop.permute.xlu0 %1108
        %1110 = vrot.lane.b32.xlu0 %v1023, 113
        %v1111 = vpop.permute.xlu0 %1110
        %v1112 = vsel %vm662, %v1105, %v1109
        %v1113 = vsel %vm662, %v1107, %v1111
        %v1114 = vsel %vm662, %v1109, %v1105
        %v1115 = vsel %vm662, %v1111, %v1107
        %v1116 = vmul.f32 %v1112, %v668
        %v1117 = vmul.f32 %v1114, %v669
        %v1118 = vmul.f32 %v1113, %v668
        %v1119 = vmul.f32 %v1115, %v669
        %1120 = vrot.lane.b32.xlu0 %v1020, 112
        %v1121 = vpop.permute.xlu0 %1120
        %1122 = vrot.lane.b32.xlu0 %v1022, 112
        %v1123 = vpop.permute.xlu0 %1122
        %1124 = vrot.lane.b32.xlu0 %v1021, 112
        %v1125 = vpop.permute.xlu0 %1124
        %1126 = vrot.lane.b32.xlu0 %v1023, 112
        %v1127 = vpop.permute.xlu0 %1126
        %v1128 = vsel %vm678, %v1121, %v1125
        %v1129 = vsel %vm678, %v1123, %v1127
        %v1130 = vsel %vm678, %v1125, %v1121
        %v1131 = vsel %vm678, %v1127, %v1123
        %v1132 = vmul.f32 %v1128, %v684
        %v1133 = vmul.f32 %v1130, %v685
        %v1134 = vmul.f32 %v1129, %v684
        %v1135 = vmul.f32 %v1131, %v685
        %1136 = vrot.lane.b32.xlu0 %v1020, 111
        %v1137 = vpop.permute.xlu0 %1136
        %1138 = vrot.lane.b32.xlu0 %v1022, 111
        %v1139 = vpop.permute.xlu0 %1138
        %1140 = vrot.lane.b32.xlu0 %v1021, 111
        %v1141 = vpop.permute.xlu0 %1140
        %1142 = vrot.lane.b32.xlu0 %v1023, 111
        %v1143 = vpop.permute.xlu0 %1142
        %v1144 = vsel %vm694, %v1137, %v1141
        %v1145 = vsel %vm694, %v1139, %v1143
        %v1146 = vsel %vm694, %v1141, %v1137
        %v1147 = vsel %vm694, %v1143, %v1139
        %v1148 = vmul.f32 %v1144, %v700
        %v1149 = vmul.f32 %v1146, %v701
        %v1150 = vmul.f32 %v1145, %v700
        %v1151 = vmul.f32 %v1147, %v701
        %v1152 = vld [vmem:[#allocation8] sm:$0xff]
        %v1153 = vld [vmem:[#allocation8 + $0x8] sm:$0xff]
        %v1154 = vld [vmem:[#allocation8 + $0x10] sm:$0xff]
        %v1155 = vld [vmem:[#allocation8 + $0x18] sm:$0xff]
        %v1156 = vld [vmem:[%s7] sm:$0xff]
        %v1157 = vld [vmem:[%s7 + $0x8] sm:$0xff]
        %1159 = vset.pattern.permute.xlu0 0
        %1160 = vperm.xlu0 %1159, %v1156
        %v1161 = vpop.permute.xlu0 %1160
        %1164 = vset.pattern.permute.xlu0 0
        %1165 = vperm.xlu0 %1164, %v1157
        %v1166 = vpop.permute.xlu0 %1165
        %v1169 = vsel %vm921, %v1153, 0
        %v1172 = vsel %vm921, %v1155, 0
        %1174 = vmatpush.msra.mxu0 %v1134
        %1175 = vmatpush.msra.mxu0 %v1132
        %1176 = vmatpush.msra.mxu0 %v1118
        %1177 = vmatpush.msra.mxu0 %v1116
        %1178 = vmatpush.msra.mxu0 %v1102
        %1179 = vmatpush.msra.mxu0 %v1100
        %1180 = vmatpush.msra.mxu0 %v1022
        %1181 = vmatpush.msra.mxu0 %v1020
        %1182 = vmatpush.msra.mxu0 %v1086
        %1183 = vmatpush.msra.mxu0 %v1084
        %1184 = vmatpush.msra.mxu0 %v1070
        %1185 = vmatpush.msra.mxu0 %v1068
        %1186 = vmatpush.msra.mxu0 %v1054
        %1187 = vmatpush.msra.mxu0 %v1052
        %1188 = vmatpush.msra.mxu0 %v1038
        %1189 = vmatpush.msra.mxu0 %v1036
        %1190 = vmatmul.f32.gmra.mxu0 %v1152
        %v1191 = vpop.f32.mrf.mxu0
        %v1192 = vadd.f32 %v1161, %v1191
        %1193 = vmatmul.f32.gmra.mxu0 %v1154
        %v1194 = vpop.f32.mrf.mxu0
        %v1195 = vadd.f32 %v1166, %v1194
        %1196 = vdwg.mxu0
        %1197 = vmatpush.msra.mxu0 0.0
        %1198 = vmatpush.msra.mxu0 0.0
        %1199 = vmatpush.msra.mxu0 0.0
        %1200 = vmatpush.msra.mxu0 0.0
        %1201 = vmatpush.msra.mxu0 0.0
        %1202 = vmatpush.msra.mxu0 0.0
        %1203 = vmatpush.msra.mxu0 0.0
        %1204 = vmatpush.msra.mxu0 0.0
        %1205 = vmatpush.msra.mxu0 0.0
        %1206 = vmatpush.msra.mxu0 0.0
        %1207 = vmatpush.msra.mxu0 0.0
        %1208 = vmatpush.msra.mxu0 0.0
        %1209 = vmatpush.msra.mxu0 0.0
        %1210 = vmatpush.msra.mxu0 0.0
        %1211 = vmatpush.msra.mxu0 %v1150
        %1212 = vmatpush.msra.mxu0 %v1148
        %1213 = vmatmul.f32.gmra.mxu0 %v1169
        %v1214 = vpop.f32.mrf.mxu0
        %v1215 = vadd.f32 %v1192, %v1214
        %1216 = vmatmul.f32.gmra.mxu0 %v1172
        %v1217 = vpop.f32.mrf.mxu0
        %v1218 = vadd.f32 %v1195, %v1217
        %1219 = vdwg.mxu0
        %1220 = vmatpush.msra.mxu0 %v1135
        %1221 = vmatpush.msra.mxu0 %v1133
        %1222 = vmatpush.msra.mxu0 %v1119
        %1223 = vmatpush.msra.mxu0 %v1117
        %1224 = vmatpush.msra.mxu0 %v1103
        %1225 = vmatpush.msra.mxu0 %v1101
        %1226 = vmatpush.msra.mxu0 %v1023
        %1227 = vmatpush.msra.mxu0 %v1021
        %1228 = vmatpush.msra.mxu0 %v1087
        %1229 = vmatpush.msra.mxu0 %v1085
        %1230 = vmatpush.msra.mxu0 %v1071
        %1231 = vmatpush.msra.mxu0 %v1069
        %1232 = vmatpush.msra.mxu0 %v1055
        %1233 = vmatpush.msra.mxu0 %v1053
        %1234 = vmatpush.msra.mxu0 %v1039
        %1235 = vmatpush.msra.mxu0 %v1037
        %1236 = vmatmul.f32.gmra.mxu0 %v1152
        %v1237 = vpop.f32.mrf.mxu0
        %v1238 = vadd.f32 %v1161, %v1237
        %1239 = vmatmul.f32.gmra.mxu0 %v1154
        %v1240 = vpop.f32.mrf.mxu0
        %v1241 = vadd.f32 %v1166, %v1240
        %1242 = vdwg.mxu0
        %1243 = vmatpush.msra.mxu0 0.0
        %1244 = vmatpush.msra.mxu0 0.0
        %1245 = vmatpush.msra.mxu0 0.0
        %1246 = vmatpush.msra.mxu0 0.0
        %1247 = vmatpush.msra.mxu0 0.0
        %1248 = vmatpush.msra.mxu0 0.0
        %1249 = vmatpush.msra.mxu0 0.0
        %1250 = vmatpush.msra.mxu0 0.0
        %1251 = vmatpush.msra.mxu0 0.0
        %1252 = vmatpush.msra.mxu0 0.0
        %1253 = vmatpush.msra.mxu0 0.0
        %1254 = vmatpush.msra.mxu0 0.0
        %1255 = vmatpush.msra.mxu0 0.0
        %1256 = vmatpush.msra.mxu0 0.0
        %1257 = vmatpush.msra.mxu0 %v1151
        %1258 = vmatpush.msra.mxu0 %v1149
        %1259 = vmatmul.f32.gmra.mxu0 %v1169
        %v1260 = vpop.f32.mrf.mxu0
        %v1261 = vadd.f32 %v1238, %v1260
        %1262 = vmatmul.f32.gmra.mxu0 %v1172
        %v1263 = vpop.f32.mrf.mxu0
        %v1264 = vadd.f32 %v1241, %v1263
        %1265 = vdwg.mxu0
        %v1266 = vmax.f32 %v1215, 0.0
        %v1267 = vmax.f32 %v1261, 0.0
        %v1268 = vmax.f32 %v1218, 0.0
        %v1269 = vmax.f32 %v1264, 0.0
        %v1270 = vld [vmem:[#allocation9] sm:$0xff]
        %v1271 = vld [vmem:[#allocation9 + $0x8] sm:$0xff]
        %v1272 = vld [vmem:[#allocation9 + $0x10] sm:$0xff]
        %v1273 = vld [vmem:[#allocation9 + $0x18] sm:$0xff]
        %v1274 = vld [vmem:[%s11] sm:$0xff]
        %v1275 = vld [vmem:[%s11 + $0x8] sm:$0xff]
        %1277 = vset.pattern.permute.xlu0 0
        %1278 = vperm.xlu0 %1277, %v1274
        %v1279 = vpop.permute.xlu0 %1278
        %1282 = vset.pattern.permute.xlu0 0
        %1283 = vperm.xlu0 %1282, %v1275
        %v1284 = vpop.permute.xlu0 %1283
        %v1287 = vsel %vm921, %v1271, 0
        %v1290 = vsel %vm921, %v1273, 0
        %1292 = vmatpush.msra.mxu0 %v1134
        %1293 = vmatpush.msra.mxu0 %v1132
        %1294 = vmatpush.msra.mxu0 %v1118
        %1295 = vmatpush.msra.mxu0 %v1116
        %1296 = vmatpush.msra.mxu0 %v1102
        %1297 = vmatpush.msra.mxu0 %v1100
        %1298 = vmatpush.msra.mxu0 %v1022
        %1299 = vmatpush.msra.mxu0 %v1020
        %1300 = vmatpush.msra.mxu0 %v1086
        %1301 = vmatpush.msra.mxu0 %v1084
        %1302 = vmatpush.msra.mxu0 %v1070
        %1303 = vmatpush.msra.mxu0 %v1068
        %1304 = vmatpush.msra.mxu0 %v1054
        %1305 = vmatpush.msra.mxu0 %v1052
        %1306 = vmatpush.msra.mxu0 %v1038
        %1307 = vmatpush.msra.mxu0 %v1036
        %1308 = vmatmul.f32.gmra.mxu0 %v1270
        %v1309 = vpop.f32.mrf.mxu0
        %v1310 = vadd.f32 %v1279, %v1309
        %1311 = vmatmul.f32.gmra.mxu0 %v1272
        %v1312 = vpop.f32.mrf.mxu0
        %v1313 = vadd.f32 %v1284, %v1312
        %1314 = vdwg.mxu0
        %1315 = vmatpush.msra.mxu0 0.0
        %1316 = vmatpush.msra.mxu0 0.0
        %1317 = vmatpush.msra.mxu0 0.0
        %1318 = vmatpush.msra.mxu0 0.0
        %1319 = vmatpush.msra.mxu0 0.0
        %1320 = vmatpush.msra.mxu0 0.0
        %1321 = vmatpush.msra.mxu0 0.0
        %1322 = vmatpush.msra.mxu0 0.0
        %1323 = vmatpush.msra.mxu0 0.0
        %1324 = vmatpush.msra.mxu0 0.0
        %1325 = vmatpush.msra.mxu0 0.0
        %1326 = vmatpush.msra.mxu0 0.0
        %1327 = vmatpush.msra.mxu0 0.0
        %1328 = vmatpush.msra.mxu0 0.0
        %1329 = vmatpush.msra.mxu0 %v1150
        %1330 = vmatpush.msra.mxu0 %v1148
        %1331 = vmatmul.f32.gmra.mxu0 %v1287
        %v1332 = vpop.f32.mrf.mxu0
        %v1333 = vadd.f32 %v1310, %v1332
        %1334 = vmatmul.f32.gmra.mxu0 %v1290
        %v1335 = vpop.f32.mrf.mxu0
        %v1336 = vadd.f32 %v1313, %v1335
        %1337 = vdwg.mxu0
        %1338 = vmatpush.msra.mxu0 %v1135
        %1339 = vmatpush.msra.mxu0 %v1133
        %1340 = vmatpush.msra.mxu0 %v1119
        %1341 = vmatpush.msra.mxu0 %v1117
        %1342 = vmatpush.msra.mxu0 %v1103
        %1343 = vmatpush.msra.mxu0 %v1101
        %1344 = vmatpush.msra.mxu0 %v1023
        %1345 = vmatpush.msra.mxu0 %v1021
        %1346 = vmatpush.msra.mxu0 %v1087
        %1347 = vmatpush.msra.mxu0 %v1085
        %1348 = vmatpush.msra.mxu0 %v1071
        %1349 = vmatpush.msra.mxu0 %v1069
        %1350 = vmatpush.msra.mxu0 %v1055
        %1351 = vmatpush.msra.mxu0 %v1053
        %1352 = vmatpush.msra.mxu0 %v1039
        %1353 = vmatpush.msra.mxu0 %v1037
        %1354 = vmatmul.f32.gmra.mxu0 %v1270
        %v1355 = vpop.f32.mrf.mxu0
        %v1356 = vadd.f32 %v1279, %v1355
        %1357 = vmatmul.f32.gmra.mxu0 %v1272
        %v1358 = vpop.f32.mrf.mxu0
        %v1359 = vadd.f32 %v1284, %v1358
        %1360 = vdwg.mxu0
        %1361 = vmatpush.msra.mxu0 0.0
        %1362 = vmatpush.msra.mxu0 0.0
        %1363 = vmatpush.msra.mxu0 0.0
        %1364 = vmatpush.msra.mxu0 0.0
        %1365 = vmatpush.msra.mxu0 0.0
        %1366 = vmatpush.msra.mxu0 0.0
        %1367 = vmatpush.msra.mxu0 0.0
        %1368 = vmatpush.msra.mxu0 0.0
        %1369 = vmatpush.msra.mxu0 0.0
        %1370 = vmatpush.msra.mxu0 0.0
        %1371 = vmatpush.msra.mxu0 0.0
        %1372 = vmatpush.msra.mxu0 0.0
        %1373 = vmatpush.msra.mxu0 0.0
        %1374 = vmatpush.msra.mxu0 0.0
        %1375 = vmatpush.msra.mxu0 %v1151
        %1376 = vmatpush.msra.mxu0 %v1149
        %1377 = vmatmul.f32.gmra.mxu0 %v1287
        %v1378 = vpop.f32.mrf.mxu0
        %v1379 = vadd.f32 %v1356, %v1378
        %1380 = vmatmul.f32.gmra.mxu0 %v1290
        %v1381 = vpop.f32.mrf.mxu0
        %v1382 = vadd.f32 %v1359, %v1381
        %1383 = vdwg.mxu0
        %v1384 = vmax.f32 %v1333, 0.0
        %v1385 = vmax.f32 %v1379, 0.0
        %v1386 = vmax.f32 %v1336, 0.0
        %v1387 = vmax.f32 %v1382, 0.0
        %1388 = vrot.lane.b32.xlu0 %v1266, 17
        %v1389 = vpop.permute.xlu0 %1388
        %1390 = vrot.lane.b32.xlu0 %v1268, 17
        %v1391 = vpop.permute.xlu0 %1390
        %1392 = vrot.lane.b32.xlu0 %v1267, 17
        %v1393 = vpop.permute.xlu0 %1392
        %1394 = vrot.lane.b32.xlu0 %v1269, 17
        %v1395 = vpop.permute.xlu0 %1394
        %v1396 = vsel %vm583, %v1389, %v1393
        %v1397 = vsel %vm583, %v1391, %v1395
        %v1398 = vsel %vm583, %v1393, %v1389
        %v1399 = vsel %vm583, %v1395, %v1391
        %v1400 = vmul.f32 %v1398, %v588
        %v1401 = vmul.f32 %v1396, %v589
        %v1402 = vmul.f32 %v1399, %v588
        %v1403 = vmul.f32 %v1397, %v589
        %1404 = vrot.lane.b32.xlu0 %v1266, 16
        %v1405 = vpop.permute.xlu0 %1404
        %1406 = vrot.lane.b32.xlu0 %v1268, 16
        %v1407 = vpop.permute.xlu0 %1406
        %1408 = vrot.lane.b32.xlu0 %v1267, 16
        %v1409 = vpop.permute.xlu0 %1408
        %1410 = vrot.lane.b32.xlu0 %v1269, 16
        %v1411 = vpop.permute.xlu0 %1410
        %v1412 = vsel %vm598, %v1405, %v1409
        %v1413 = vsel %vm598, %v1407, %v1411
        %v1414 = vsel %vm598, %v1409, %v1405
        %v1415 = vsel %vm598, %v1411, %v1407
        %v1416 = vmul.f32 %v1414, %v604
        %v1417 = vmul.f32 %v1412, %v605
        %v1418 = vmul.f32 %v1415, %v604
        %v1419 = vmul.f32 %v1413, %v605
        %1420 = vrot.lane.b32.xlu0 %v1266, 15
        %v1421 = vpop.permute.xlu0 %1420
        %1422 = vrot.lane.b32.xlu0 %v1268, 15
        %v1423 = vpop.permute.xlu0 %1422
        %1424 = vrot.lane.b32.xlu0 %v1267, 15
        %v1425 = vpop.permute.xlu0 %1424
        %1426 = vrot.lane.b32.xlu0 %v1269, 15
        %v1427 = vpop.permute.xlu0 %1426
        %v1428 = vsel %vm614, %v1421, %v1425
        %v1429 = vsel %vm614, %v1423, %v1427
        %v1430 = vsel %vm614, %v1425, %v1421
        %v1431 = vsel %vm614, %v1427, %v1423
        %v1432 = vmul.f32 %v1430, %v620
        %v1433 = vmul.f32 %v1428, %v621
        %v1434 = vmul.f32 %v1431, %v620
        %v1435 = vmul.f32 %v1429, %v621
        %1436 = vrot.lane.b32.xlu0 %v1266, 1
        %v1437 = vpop.permute.xlu0 %1436
        %1438 = vrot.lane.b32.xlu0 %v1268, 1
        %v1439 = vpop.permute.xlu0 %1438
        %1440 = vrot.lane.b32.xlu0 %v1267, 1
        %v1441 = vpop.permute.xlu0 %1440
        %1442 = vrot.lane.b32.xlu0 %v1269, 1
        %v1443 = vpop.permute.xlu0 %1442
        %v1444 = vsel %vm630, %v1437, %v1441
        %v1445 = vsel %vm630, %v1439, %v1443
        %v1446 = vsel %vm630, %v1441, %v1437
        %v1447 = vsel %vm630, %v1443, %v1439
        %v1448 = vmul.f32 %v1446, %v636
        %v1449 = vmul.f32 %v1444, %v637
        %v1450 = vmul.f32 %v1447, %v636
        %v1451 = vmul.f32 %v1445, %v637
        %1452 = vrot.lane.b32.xlu0 %v1266, 127
        %v1453 = vpop.permute.xlu0 %1452
        %1454 = vrot.lane.b32.xlu0 %v1268, 127
        %v1455 = vpop.permute.xlu0 %1454
        %1456 = vrot.lane.b32.xlu0 %v1267, 127
        %v1457 = vpop.permute.xlu0 %1456
        %1458 = vrot.lane.b32.xlu0 %v1269, 127
        %v1459 = vpop.permute.xlu0 %1458
        %v1460 = vsel %vm646, %v1453, %v1457
        %v1461 = vsel %vm646, %v1455, %v1459
        %v1462 = vsel %vm646, %v1457, %v1453
        %v1463 = vsel %vm646, %v1459, %v1455
        %v1464 = vmul.f32 %v1460, %v652
        %v1465 = vmul.f32 %v1462, %v653
        %v1466 = vmul.f32 %v1461, %v652
        %v1467 = vmul.f32 %v1463, %v653
        %1468 = vrot.lane.b32.xlu0 %v1266, 113
        %v1469 = vpop.permute.xlu0 %1468
        %1470 = vrot.lane.b32.xlu0 %v1268, 113
        %v1471 = vpop.permute.xlu0 %1470
        %1472 = vrot.lane.b32.xlu0 %v1267, 113
        %v1473 = vpop.permute.xlu0 %1472
        %1474 = vrot.lane.b32.xlu0 %v1269, 113
        %v1475 = vpop.permute.xlu0 %1474
        %v1476 = vsel %vm662, %v1469, %v1473
        %v1477 = vsel %vm662, %v1471, %v1475
        %v1478 = vsel %vm662, %v1473, %v1469
        %v1479 = vsel %vm662, %v1475, %v1471
        %v1480 = vmul.f32 %v1476, %v668
        %v1481 = vmul.f32 %v1478, %v669
        %v1482 = vmul.f32 %v1477, %v668
        %v1483 = vmul.f32 %v1479, %v669
        %1484 = vrot.lane.b32.xlu0 %v1266, 112
        %v1485 = vpop.permute.xlu0 %1484
        %1486 = vrot.lane.b32.xlu0 %v1268, 112
        %v1487 = vpop.permute.xlu0 %1486
        %1488 = vrot.lane.b32.xlu0 %v1267, 112
        %v1489 = vpop.permute.xlu0 %1488
        %1490 = vrot.lane.b32.xlu0 %v1269, 112
        %v1491 = vpop.permute.xlu0 %1490
        %v1492 = vsel %vm678, %v1485, %v1489
        %v1493 = vsel %vm678, %v1487, %v1491
        %v1494 = vsel %vm678, %v1489, %v1485
        %v1495 = vsel %vm678, %v1491, %v1487
        %v1496 = vmul.f32 %v1492, %v684
        %v1497 = vmul.f32 %v1494, %v685
        %v1498 = vmul.f32 %v1493, %v684
        %v1499 = vmul.f32 %v1495, %v685
        %1500 = vrot.lane.b32.xlu0 %v1266, 111
        %v1501 = vpop.permute.xlu0 %1500
        %1502 = vrot.lane.b32.xlu0 %v1268, 111
        %v1503 = vpop.permute.xlu0 %1502
        %1504 = vrot.lane.b32.xlu0 %v1267, 111
        %v1505 = vpop.permute.xlu0 %1504
        %1506 = vrot.lane.b32.xlu0 %v1269, 111
        %v1507 = vpop.permute.xlu0 %1506
        %v1508 = vsel %vm694, %v1501, %v1505
        %v1509 = vsel %vm694, %v1503, %v1507
        %v1510 = vsel %vm694, %v1505, %v1501
        %v1511 = vsel %vm694, %v1507, %v1503
        %v1512 = vmul.f32 %v1508, %v700
        %v1513 = vmul.f32 %v1510, %v701
        %v1514 = vmul.f32 %v1509, %v700
        %v1515 = vmul.f32 %v1511, %v701
        %v1516 = vld [vmem:[%s8] sm:$0x3]
        %v1517 = vld [vmem:[#allocation2] sm:$0x1]
        %1519 = vset.pattern.permute.xlu0 0
        %1520 = vperm.xlu0 %1519, %v1517
        %v1521 = vpop.permute.xlu0 %1520
        %v1523 = vperm.slane %v1521, 0
        %v1525 = vperm.slane %v1516, 0
        %v1526 = vperm.slane %v1516, 1
        %v1528 = vsel %vm921, %v1526, 0
        %1530 = vmatpush.msra.mxu0 %v1498
        %1531 = vmatpush.msra.mxu0 %v1496
        %1532 = vmatpush.msra.mxu0 %v1482
        %1533 = vmatpush.msra.mxu0 %v1480
        %1534 = vmatpush.msra.mxu0 %v1466
        %1535 = vmatpush.msra.mxu0 %v1464
        %1536 = vmatpush.msra.mxu0 %v1268
        %1537 = vmatpush.msra.mxu0 %v1266
        %1538 = vmatpush.msra.mxu0 %v1450
        %1539 = vmatpush.msra.mxu0 %v1448
        %1540 = vmatpush.msra.mxu0 %v1434
        %1541 = vmatpush.msra.mxu0 %v1432
        %1542 = vmatpush.msra.mxu0 %v1418
        %1543 = vmatpush.msra.mxu0 %v1416
        %1544 = vmatpush.msra.mxu0 %v1402
        %1545 = vmatpush.msra.mxu0 %v1400
        %1546 = vmatmul.f32.gmra.mxu0 %v1525
        %v1547 = vpop.f32.mrf.mxu0
        %v1548 = vadd.f32 %v1523, %v1547
        %1549 = vdwg.mxu0
        %1550 = vmatpush.msra.mxu0 0.0
        %1551 = vmatpush.msra.mxu0 0.0
        %1552 = vmatpush.msra.mxu0 0.0
        %1553 = vmatpush.msra.mxu0 0.0
        %1554 = vmatpush.msra.mxu0 0.0
        %1555 = vmatpush.msra.mxu0 0.0
        %1556 = vmatpush.msra.mxu0 0.0
        %1557 = vmatpush.msra.mxu0 0.0
        %1558 = vmatpush.msra.mxu0 0.0
        %1559 = vmatpush.msra.mxu0 0.0
        %1560 = vmatpush.msra.mxu0 0.0
        %1561 = vmatpush.msra.mxu0 0.0
        %1562 = vmatpush.msra.mxu0 0.0
        %1563 = vmatpush.msra.mxu0 0.0
        %1564 = vmatpush.msra.mxu0 %v1514
        %1565 = vmatpush.msra.mxu0 %v1512
        %1566 = vmatmul.f32.gmra.mxu0 %v1528
        %v1567 = vpop.f32.mrf.mxu0
        %v1568 = vadd.f32 %v1548, %v1567
        %1569 = vdwg.mxu0
        %1570 = vmatpush.msra.mxu0 %v1499
        %1571 = vmatpush.msra.mxu0 %v1497
        %1572 = vmatpush.msra.mxu0 %v1483
        %1573 = vmatpush.msra.mxu0 %v1481
        %1574 = vmatpush.msra.mxu0 %v1467
        %1575 = vmatpush.msra.mxu0 %v1465
        %1576 = vmatpush.msra.mxu0 %v1269
        %1577 = vmatpush.msra.mxu0 %v1267
        %1578 = vmatpush.msra.mxu0 %v1451
        %1579 = vmatpush.msra.mxu0 %v1449
        %1580 = vmatpush.msra.mxu0 %v1435
        %1581 = vmatpush.msra.mxu0 %v1433
        %1582 = vmatpush.msra.mxu0 %v1419
        %1583 = vmatpush.msra.mxu0 %v1417
        %1584 = vmatpush.msra.mxu0 %v1403
        %1585 = vmatpush.msra.mxu0 %v1401
        %1586 = vmatmul.f32.gmra.mxu0 %v1525
        %v1587 = vpop.f32.mrf.mxu0
        %v1588 = vadd.f32 %v1523, %v1587
        %1589 = vdwg.mxu0
        %1590 = vmatpush.msra.mxu0 0.0
        %1591 = vmatpush.msra.mxu0 0.0
        %1592 = vmatpush.msra.mxu0 0.0
        %1593 = vmatpush.msra.mxu0 0.0
        %1594 = vmatpush.msra.mxu0 0.0
        %1595 = vmatpush.msra.mxu0 0.0
        %1596 = vmatpush.msra.mxu0 0.0
        %1597 = vmatpush.msra.mxu0 0.0
        %1598 = vmatpush.msra.mxu0 0.0
        %1599 = vmatpush.msra.mxu0 0.0
        %1600 = vmatpush.msra.mxu0 0.0
        %1601 = vmatpush.msra.mxu0 0.0
        %1602 = vmatpush.msra.mxu0 0.0
        %1603 = vmatpush.msra.mxu0 0.0
        %1604 = vmatpush.msra.mxu0 %v1515
        %1605 = vmatpush.msra.mxu0 %v1513
        %1606 = vmatmul.f32.gmra.mxu0 %v1528
        %v1607 = vpop.f32.mrf.mxu0
        %v1608 = vadd.f32 %v1588, %v1607
        %1609 = vdwg.mxu0
        %1610 = vrot.lane.b32.xlu0 %v1384, 17
        %v1611 = vpop.permute.xlu0 %1610
        %1612 = vrot.lane.b32.xlu0 %v1386, 17
        %v1613 = vpop.permute.xlu0 %1612
        %1614 = vrot.lane.b32.xlu0 %v1385, 17
        %v1615 = vpop.permute.xlu0 %1614
        %1616 = vrot.lane.b32.xlu0 %v1387, 17
        %v1617 = vpop.permute.xlu0 %1616
        %v1618 = vsel %vm583, %v1611, %v1615
        %v1619 = vsel %vm583, %v1613, %v1617
        %v1620 = vsel %vm583, %v1615, %v1611
        %v1621 = vsel %vm583, %v1617, %v1613
        %v1622 = vmul.f32 %v1620, %v588
        %v1623 = vmul.f32 %v1618, %v589
        %v1624 = vmul.f32 %v1621, %v588
        %v1625 = vmul.f32 %v1619, %v589
        %1626 = vrot.lane.b32.xlu0 %v1384, 16
        %v1627 = vpop.permute.xlu0 %1626
        %1628 = vrot.lane.b32.xlu0 %v1386, 16
        %v1629 = vpop.permute.xlu0 %1628
        %1630 = vrot.lane.b32.xlu0 %v1385, 16
        %v1631 = vpop.permute.xlu0 %1630
        %1632 = vrot.lane.b32.xlu0 %v1387, 16
        %v1633 = vpop.permute.xlu0 %1632
        %v1634 = vsel %vm598, %v1627, %v1631
        %v1635 = vsel %vm598, %v1629, %v1633
        %v1636 = vsel %vm598, %v1631, %v1627
        %v1637 = vsel %vm598, %v1633, %v1629
        %v1638 = vmul.f32 %v1636, %v604
        %v1639 = vmul.f32 %v1634, %v605
        %v1640 = vmul.f32 %v1637, %v604
        %v1641 = vmul.f32 %v1635, %v605
        %1642 = vrot.lane.b32.xlu0 %v1384, 15
        %v1643 = vpop.permute.xlu0 %1642
        %1644 = vrot.lane.b32.xlu0 %v1386, 15
        %v1645 = vpop.permute.xlu0 %1644
        %1646 = vrot.lane.b32.xlu0 %v1385, 15
        %v1647 = vpop.permute.xlu0 %1646
        %1648 = vrot.lane.b32.xlu0 %v1387, 15
        %v1649 = vpop.permute.xlu0 %1648
        %v1650 = vsel %vm614, %v1643, %v1647
        %v1651 = vsel %vm614, %v1645, %v1649
        %v1652 = vsel %vm614, %v1647, %v1643
        %v1653 = vsel %vm614, %v1649, %v1645
        %v1654 = vmul.f32 %v1652, %v620
        %v1655 = vmul.f32 %v1650, %v621
        %v1656 = vmul.f32 %v1653, %v620
        %v1657 = vmul.f32 %v1651, %v621
        %1658 = vrot.lane.b32.xlu0 %v1384, 1
        %v1659 = vpop.permute.xlu0 %1658
        %1660 = vrot.lane.b32.xlu0 %v1386, 1
        %v1661 = vpop.permute.xlu0 %1660
        %1662 = vrot.lane.b32.xlu0 %v1385, 1
        %v1663 = vpop.permute.xlu0 %1662
        %1664 = vrot.lane.b32.xlu0 %v1387, 1
        %v1665 = vpop.permute.xlu0 %1664
        %v1666 = vsel %vm630, %v1659, %v1663
        %v1667 = vsel %vm630, %v1661, %v1665
        %v1668 = vsel %vm630, %v1663, %v1659
        %v1669 = vsel %vm630, %v1665, %v1661
        %v1670 = vmul.f32 %v1668, %v636
        %v1671 = vmul.f32 %v1666, %v637
        %v1672 = vmul.f32 %v1669, %v636
        %v1673 = vmul.f32 %v1667, %v637
        %1674 = vrot.lane.b32.xlu0 %v1384, 127
        %v1675 = vpop.permute.xlu0 %1674
        %1676 = vrot.lane.b32.xlu0 %v1386, 127
        %v1677 = vpop.permute.xlu0 %1676
        %1678 = vrot.lane.b32.xlu0 %v1385, 127
        %v1679 = vpop.permute.xlu0 %1678
        %1680 = vrot.lane.b32.xlu0 %v1387, 127
        %v1681 = vpop.permute.xlu0 %1680
        %v1682 = vsel %vm646, %v1675, %v1679
        %v1683 = vsel %vm646, %v1677, %v1681
        %v1684 = vsel %vm646, %v1679, %v1675
        %v1685 = vsel %vm646, %v1681, %v1677
        %v1686 = vmul.f32 %v1682, %v652
        %v1687 = vmul.f32 %v1684, %v653
        %v1688 = vmul.f32 %v1683, %v652
        %v1689 = vmul.f32 %v1685, %v653
        %1690 = vrot.lane.b32.xlu0 %v1384, 113
        %v1691 = vpop.permute.xlu0 %1690
        %1692 = vrot.lane.b32.xlu0 %v1386, 113
        %v1693 = vpop.permute.xlu0 %1692
        %1694 = vrot.lane.b32.xlu0 %v1385, 113
        %v1695 = vpop.permute.xlu0 %1694
        %1696 = vrot.lane.b32.xlu0 %v1387, 113
        %v1697 = vpop.permute.xlu0 %1696
        %v1698 = vsel %vm662, %v1691, %v1695
        %v1699 = vsel %vm662, %v1693, %v1697
        %v1700 = vsel %vm662, %v1695, %v1691
        %v1701 = vsel %vm662, %v1697, %v1693
        %v1702 = vmul.f32 %v1698, %v668
        %v1703 = vmul.f32 %v1700, %v669
        %v1704 = vmul.f32 %v1699, %v668
        %v1705 = vmul.f32 %v1701, %v669
        %1706 = vrot.lane.b32.xlu0 %v1384, 112
        %v1707 = vpop.permute.xlu0 %1706
        %1708 = vrot.lane.b32.xlu0 %v1386, 112
        %v1709 = vpop.permute.xlu0 %1708
        %1710 = vrot.lane.b32.xlu0 %v1385, 112
        %v1711 = vpop.permute.xlu0 %1710
        %1712 = vrot.lane.b32.xlu0 %v1387, 112
        %v1713 = vpop.permute.xlu0 %1712
        %v1714 = vsel %vm678, %v1707, %v1711
        %v1715 = vsel %vm678, %v1709, %v1713
        %v1716 = vsel %vm678, %v1711, %v1707
        %v1717 = vsel %vm678, %v1713, %v1709
        %v1718 = vmul.f32 %v1714, %v684
        %v1719 = vmul.f32 %v1716, %v685
        %v1720 = vmul.f32 %v1715, %v684
        %v1721 = vmul.f32 %v1717, %v685
        %1722 = vrot.lane.b32.xlu0 %v1384, 111
        %v1723 = vpop.permute.xlu0 %1722
        %1724 = vrot.lane.b32.xlu0 %v1386, 111
        %v1725 = vpop.permute.xlu0 %1724
        %1726 = vrot.lane.b32.xlu0 %v1385, 111
        %v1727 = vpop.permute.xlu0 %1726
        %1728 = vrot.lane.b32.xlu0 %v1387, 111
        %v1729 = vpop.permute.xlu0 %1728
        %v1730 = vsel %vm694, %v1723, %v1727
        %v1731 = vsel %vm694, %v1725, %v1729
        %v1732 = vsel %vm694, %v1727, %v1723
        %v1733 = vsel %vm694, %v1729, %v1725
        %v1734 = vmul.f32 %v1730, %v700
        %v1735 = vmul.f32 %v1732, %v701
        %v1736 = vmul.f32 %v1731, %v700
        %v1737 = vmul.f32 %v1733, %v701
        %v1738 = vld [vmem:[%s12] sm:$0x77]
        %v1739 = vld [vmem:[%s13] sm:$0x7]
        %1741 = vset.pattern.permute.xlu0 0
        %1742 = vperm.xlu0 %1741, %v1739
        %v1743 = vpop.permute.xlu0 %1742
        %1746 = vst [vmem:[#allocation1] ss:$2 sm:$0xff] %v1738
        %v1747 = vld.sshfl [vmem:[#allocation1] sm:$0xff pattern:$0x75316420]
        %v1748 = vld.sshfl [vmem:[#allocation1 + $0x8] sm:$0xff pattern:$0x75316420]
        %v1750 = vsel %vm921, %v1748, 0
        %1752 = vmatpush.msra.mxu0 %v1720
        %1753 = vmatpush.msra.mxu0 %v1718
        %1754 = vmatpush.msra.mxu0 %v1704
        %1755 = vmatpush.msra.mxu0 %v1702
        %1756 = vmatpush.msra.mxu0 %v1688
        %1757 = vmatpush.msra.mxu0 %v1686
        %1758 = vmatpush.msra.mxu0 %v1386
        %1759 = vmatpush.msra.mxu0 %v1384
        %1760 = vmatpush.msra.mxu0 %v1672
        %1761 = vmatpush.msra.mxu0 %v1670
        %1762 = vmatpush.msra.mxu0 %v1656
        %1763 = vmatpush.msra.mxu0 %v1654
        %1764 = vmatpush.msra.mxu0 %v1640
        %1765 = vmatpush.msra.mxu0 %v1638
        %1766 = vmatpush.msra.mxu0 %v1624
        %1767 = vmatpush.msra.mxu0 %v1622
        %1768 = vmatmul.f32.gmra.mxu0 %v1747
        %v1769 = vpop.f32.mrf.mxu0
        %v1770 = vadd.f32 %v1743, %v1769
        %1771 = vdwg.mxu0
        %1772 = vmatpush.msra.mxu0 0.0
        %1773 = vmatpush.msra.mxu0 0.0
        %1774 = vmatpush.msra.mxu0 0.0
        %1775 = vmatpush.msra.mxu0 0.0
        %1776 = vmatpush.msra.mxu0 0.0
        %1777 = vmatpush.msra.mxu0 0.0
        %1778 = vmatpush.msra.mxu0 0.0
        %1779 = vmatpush.msra.mxu0 0.0
        %1780 = vmatpush.msra.mxu0 0.0
        %1781 = vmatpush.msra.mxu0 0.0
        %1782 = vmatpush.msra.mxu0 0.0
        %1783 = vmatpush.msra.mxu0 0.0
        %1784 = vmatpush.msra.mxu0 0.0
        %1785 = vmatpush.msra.mxu0 0.0
        %1786 = vmatpush.msra.mxu0 %v1736
        %1787 = vmatpush.msra.mxu0 %v1734
        %1788 = vmatmul.f32.gmra.mxu0 %v1750
        %v1789 = vpop.f32.mrf.mxu0
        %v1790 = vadd.f32 %v1770, %v1789
        %1791 = vdwg.mxu0
        %1792 = vmatpush.msra.mxu0 %v1721
        %1793 = vmatpush.msra.mxu0 %v1719
        %1794 = vmatpush.msra.mxu0 %v1705
        %1795 = vmatpush.msra.mxu0 %v1703
        %1796 = vmatpush.msra.mxu0 %v1689
        %1797 = vmatpush.msra.mxu0 %v1687
        %1798 = vmatpush.msra.mxu0 %v1387
        %1799 = vmatpush.msra.mxu0 %v1385
        %1800 = vmatpush.msra.mxu0 %v1673
        %1801 = vmatpush.msra.mxu0 %v1671
        %1802 = vmatpush.msra.mxu0 %v1657
        %1803 = vmatpush.msra.mxu0 %v1655
        %1804 = vmatpush.msra.mxu0 %v1641
        %1805 = vmatpush.msra.mxu0 %v1639
        %1806 = vmatpush.msra.mxu0 %v1625
        %1807 = vmatpush.msra.mxu0 %v1623
        %1808 = vmatmul.f32.gmra.mxu0 %v1747
        %v1809 = vpop.f32.mrf.mxu0
        %v1810 = vadd.f32 %v1743, %v1809
        %1811 = vdwg.mxu0
        %1812 = vmatpush.msra.mxu0 0.0
        %1813 = vmatpush.msra.mxu0 0.0
        %1814 = vmatpush.msra.mxu0 0.0
        %1815 = vmatpush.msra.mxu0 0.0
        %1816 = vmatpush.msra.mxu0 0.0
        %1817 = vmatpush.msra.mxu0 0.0
        %1818 = vmatpush.msra.mxu0 0.0
        %1819 = vmatpush.msra.mxu0 0.0
        %1820 = vmatpush.msra.mxu0 0.0
        %1821 = vmatpush.msra.mxu0 0.0
        %1822 = vmatpush.msra.mxu0 0.0
        %1823 = vmatpush.msra.mxu0 0.0
        %1824 = vmatpush.msra.mxu0 0.0
        %1825 = vmatpush.msra.mxu0 0.0
        %1826 = vmatpush.msra.mxu0 %v1737
        %1827 = vmatpush.msra.mxu0 %v1735
        %1828 = vmatmul.f32.gmra.mxu0 %v1750
        %v1829 = vpop.f32.mrf.mxu0
        %v1830 = vadd.f32 %v1810, %v1829
        %1831 = vdwg.mxu0
        %v1832 = vmul.f32 %v1790, %v1790
        %v1833 = vmul.f32 %v1830, %v1830
        %vm1834 = vcmask 1042432
        %v1835 = vsel %vm1834, %v1832, 0.0
        %v1836 = vrot.slane %v1835, 4
        %v1837 = vadd.f32 %v1835, %v1836
        %v1838 = vrot.slane %v1837, 2
        %v1839 = vadd.f32 %v1837, %v1838
        %v1840 = vrot.slane %v1839, 1
        %v1841 = vadd.f32 %v1839, %v1840
        %v1842 = vsel %vm1834, %v1833, 0.0
        %v1843 = vrot.slane %v1842, 4
        %v1844 = vadd.f32 %v1842, %v1843
        %v1845 = vrot.slane %v1844, 2
        %v1846 = vadd.f32 %v1844, %v1845
        %v1847 = vrot.slane %v1846, 1
        %v1848 = vadd.f32 %v1846, %v1847
        %v1849 = vadd.f32 %v1841, 1e-06
        %v1850 = vadd.f32 %v1848, 1e-06
        %v1851 = vrsqrt.pop %v1849
        %v1852 = vmul.f32 %v1851, %v1849
        %v1853 = vmul.f32 %v1852, %v1851
        %v1854 = vmul.f32 0.5, %v1853
        %v1855 = vsub.f32 1.5, %v1854
        %v1856 = vmul.f32 %v1851, %v1855
        %vm1857 = vweird.f32 %v1849
        %vm1858 = vweird.f32 %v1851
        %vm1859 = vmor %vm1857, %vm1858
        %v1860 = vsel %vm1859, %v1851, %v1856
        %v1861 = vrsqrt.pop %v1850
        %v1862 = vmul.f32 %v1861, %v1850
        %v1863 = vmul.f32 %v1862, %v1861
        %v1864 = vmul.f32 0.5, %v1863
        %v1865 = vsub.f32 1.5, %v1864
        %v1866 = vmul.f32 %v1861, %v1865
        %vm1867 = vweird.f32 %v1850
        %vm1868 = vweird.f32 %v1861
        %vm1869 = vmor %vm1867, %vm1868
        %v1870 = vsel %vm1869, %v1861, %v1866
        %v1871 = vmul.f32 %v1790, %v1860
        %v1872 = vmul.f32 %v1830, %v1870
        %v1875 = vrot.slane %v1608, 7
        %vm1876 = vcmask 1040384
        %v1877 = vsel %vm1876, %v1568, %v1875
        %v1879 = vlaneseq
        %vm1880 = vcmp.ge.s32.totalorder %v1879, 0
        %vm1881 = vcmp.lt.s32.totalorder %v1879, 256
        %vm1882 = vmand %vm1880, %vm1881
        %1883 = vst.msk [vmem:[%s557] sm:$0x3] %vm1882, %v1877
        %v1886 = vrot.slane %v1872, 4
        %vm1887 = vcmask 1043456
        %v1888 = vsel %vm1887, %v1871, %v1886
        %1890 = vst [vmem:[%s574] sm:$0x77] %v1888
        %s1891 = sand.u32 %s342, 1
        %s1892 = scalar_lea.sflag [#allocation5], %s1891
        %s1893 = sand.u32 %s342, 1
        %s1894 = smul.addr %s1893, 2
        %s1895 = scalar_lea.vmem [#allocation11], %s1894
        %p1896 = scmp.lt.s32.totalorder %s35, 1
        %s1897 = scalar_select %p1896, %s35, 1
        %s1898 = smul.addr %s1897, 2
        %s1899 = smul.addr %s1898, 4
        %s1900 = scalar_lea.vmem %s15, %s1899
        // Predicated region
        $region93: #{tpu_custom_call.1} parent=75 // pred_check
          %p1901 = pneg %p352
        $region94: #{tpu_custom_call.1} parent=75 // pred_check_branch
          %1903 = sbr.rel (%p1901) target = $region96
        $region95: #{tpu_custom_call.1} parent=75 // pred_region
          %1905 = vsyncadd %s1892, 0
          %s1906 = smul.addr %s35, 2
          %s1907 = scalar_lea.hbm %s14, %s1906
          %s1909 = sshll.u32 %s1895, 4
          %s1910 = int_to_ptr.vmem [resolvable:$true] %s1909
          %s1911 = sshll.u32 %s1907, 4
          %s1912 = int_to_ptr.hbm [resolvable:$true] %s1911
          %1914 = dma.vmem_to_hbm [thread:$0]  %s1910, 32, %s1912, %s1892
        $region96: #{tpu_custom_call.1} parent=75 // pred_fallthru
          _
        // Predicated region
        $region97: #{tpu_custom_call.1} parent=75 // pred_check
          %p1915 = pneg %p378
        $region98: #{tpu_custom_call.1} parent=75 // pred_check_branch
          %1917 = sbr.rel (%p1915) target = $region100
        $region99: #{tpu_custom_call.1} parent=75 // pred_region
          _
        $region100: #{tpu_custom_call.1} parent=75 // pred_fallthru
          _
      $region76: #{tpu_custom_call.1} parent=5 // pred_fallthru
        _
      %p1918 = scmp.le.s32.totalorder 2, %s30
      // Predicated region
      $region101: #{tpu_custom_call.1} parent=5 // pred_check
        %p1919 = pneg %p1918
      $region102: #{tpu_custom_call.1} parent=5 // pred_check_branch
        %1921 = sbr.rel (%p1919) target = $region104
      $region103: #{tpu_custom_call.1} parent=5 // pred_region
        %s1922 = ssub.s32 %s30, 2
        // Predicated region
        $region105: #{tpu_custom_call.1} parent=103 // pred_check
          %p1923 = pneg %p358
        $region106: #{tpu_custom_call.1} parent=103 // pred_check_branch
          %1925 = sbr.rel (%p1923) target = $region108
        $region107: #{tpu_custom_call.1} parent=103 // pred_region
          %s1926 = sand.u32 %s343, 1
          %s1927 = scalar_lea.sflag [#allocation5], %s1926
          %s1928 = sand.u32 %s343, 1
          %s1929 = smul.addr %s1928, 2
          %s1930 = scalar_lea.vmem [#allocation11], %s1929
          %1932 = dma.done %s1927, 32
        $region108: #{tpu_custom_call.1} parent=103 // pred_fallthru
          _
        // Predicated region
        $region109: #{tpu_custom_call.1} parent=103 // pred_check
          %p1933 = pneg %p384
        $region110: #{tpu_custom_call.1} parent=103 // pred_check_branch
          %1935 = sbr.rel (%p1933) target = $region112
        $region111: #{tpu_custom_call.1} parent=103 // pred_region
          %p1936 = scmp.lt.s32.totalorder %s36, 1
          %s1937 = scalar_select %p1936, %s36, 1
          %s1938 = smul.addr %s1937, 2
          %s1939 = smul.addr %s1938, 4
          %s1940 = scalar_lea.vmem %s15, %s1939
        $region112: #{tpu_custom_call.1} parent=103 // pred_fallthru
          _
      $region104: #{tpu_custom_call.1} parent=5 // pred_fallthru
        _
    $region6: #{tpu_custom_call.1} parent=1 // loop_footer
      %s34 = sadd.s32 1, %s30
    $region7: #{tpu_custom_call.1} parent=1 // loop_footer_branch
      %29 = sbr.rel target = $region3
    $region8: #{tpu_custom_call.1} parent=1 // loop_exit
      _
    %1941 = vsyncpa [#allocation4], 1
    %s1942 = scalar_lea.sflag [#allocation4], 1
    %1943 = vsyncpa %s1942, 1
    %1944 = vsyncpa [#allocation7], 1
    %1945 = vsyncpa [#allocation10], 1
    %1946 = vsyncpa [#allocation5], 1
    %s1947 = scalar_lea.sflag [#allocation5], 1
    %1948 = vsyncpa %s1947, 1

</llo_original>
